<compile_context>
chip_gen: v7x
topology: tpu7x:2x2x1
jax: 0.10.0
libtpu: 0.0.40
codegen_flags: <defaults>
</compile_context>

<pallas_src>
import jax
import jax.numpy as jnp
from jax.experimental import pallas as pl
from jax.experimental.pallas import tpu as pltpu


def _round_up(x, m):
    return ((x + m - 1) // m) * m


def _make_mlp_kernel(num_linear, use_layernorm, last_relu, eps=1e-5):
    """Build a kernel for `num_linear` Linear layers (+optional LayerNorm)."""

    def kernel(*refs):
        x_ref = refs[0]
        lin_refs = refs[1:1 + 2 * num_linear]          # interleaved (W, b)
        idx = 1 + 2 * num_linear
        if use_layernorm:
            g_ref, beta_ref = refs[idx], refs[idx + 1]
            idx += 2
        o_ref = refs[idx]

        # x arrives in its native dtype; narrow to bf16 only for the MXU.
        h = x_ref[...].astype(jnp.bfloat16)
        for l in range(num_linear):
            w = lin_refs[2 * l][...]                    # bf16 weights
            b = lin_refs[2 * l + 1][...]                # f32 bias (1, fan_out)
            y = jnp.dot(h, w, preferred_element_type=jnp.float32) + b
            last = (l == num_linear - 1)
            if (not last) or last_relu:
                y = jnp.maximum(y, 0.0)                 # ReLU in f32
            h = y if last else y.astype(jnp.bfloat16)   # re-pack for next matmul

        y = h                                           # f32
        if use_layernorm:
            # Per-row LayerNorm: safe even on the ragged last block's garbage
            # rows (no cross-row reduction; OOB rows are never written back).
            mean = jnp.mean(y, axis=-1, keepdims=True)
            var = jnp.mean((y - mean) ** 2, axis=-1, keepdims=True)
            y = (y - mean) * jax.lax.rsqrt(var + eps)
            y = y * g_ref[...] + beta_ref[...]
        o_ref[...] = y.astype(o_ref.dtype)

    return kernel


def prepare_mlp_params(linear_params, ln_params=None):
    """One-time preprocessing (hoist out of the forward path):
    W -> bf16 MXU operands, biases / LayerNorm params -> (1, N) f32."""
    lin = tuple((jnp.asarray(w, jnp.bfloat16),
                 jnp.asarray(b, jnp.float32).reshape(1, -1))
                for (w, b) in linear_params)
    ln = None
    if ln_params is not None:
        ln = tuple(jnp.asarray(p, jnp.float32).reshape(1, -1) for p in ln_params)
    return lin, ln


def mlp_pallas(x, prepared_linear, prepared_ln=None, *, last_relu=False,
               tile_m=1024, out_dtype=None):
    """x: (B, in_dim) -> (B, out_dim).  prepared_linear: tuple of
    (W[fi,fo] bf16, b[1,fo] f32) from prepare_mlp_params()."""
    B, in_dim = x.shape
    num_linear = len(prepared_linear)
    out_dim = prepared_linear[-1][0].shape[1]
    out_dtype = jnp.dtype(out_dtype or x.dtype)

    # Batch tile: multiple of 16 (bf16 sublane packing); cap so the grid keeps
    # >= 2 (even) steps for v7x's two TensorCores; clamp for tiny B.
    tile_m = _round_up(tile_m, 16)
    tile_m = min(tile_m, _round_up(pl.cdiv(B, 2), 16))
    tile_m = max(16, tile_m)
    grid_m = pl.cdiv(B, tile_m)                         # ragged last block OK

    _full = lambda i: (0, 0)                            # grid-invariant params
    flat_args = [x]
    in_specs = [pl.BlockSpec((tile_m, in_dim), lambda i: (i, 0))]
    for (w, b) in prepared_linear:
        flat_args += [w, b]
        in_specs += [pl.BlockSpec(w.shape, _full), pl.BlockSpec(b.shape, _full)]
    use_ln = prepared_ln is not None
    if use_ln:
        for p in prepared_ln:                           # gamma, beta
            flat_args.append(p)
            in_specs.append(pl.BlockSpec(p.shape, _full))

    kernel = _make_mlp_kernel(num_linear, use_ln, last_relu)

    # Cost estimate kept in sync: x at its native byte width, no padded rows.
    flops = 2 * B * sum(int(w.shape[0]) * int(w.shape[1])
                        for (w, _) in prepared_linear)
    param_bytes = sum(int(w.size) * w.dtype.itemsize + int(b.size) * b.dtype.itemsize
                      for (w, b) in prepared_linear)
    if use_ln:
        param_bytes += sum(int(p.size) * p.dtype.itemsize for p in prepared_ln)
    bytes_accessed = (int(x.size) * x.dtype.itemsize + param_bytes
                      + B * out_dim * out_dtype.itemsize)
    cost = pl.CostEstimate(flops=int(flops),
                           transcendentals=int(B) if use_ln else 0,
                           bytes_accessed=int(bytes_accessed))

    # Scoped VMEM: double-buffered x/out tiles + (tiny, also double-buffered)
    # params, with 2x headroom.  Well under v7x's 64 MiB even at tile_m=1024.
    vmem_needed = (2 * tile_m * in_dim * x.dtype.itemsize
                   + 2 * tile_m * out_dim * out_dtype.itemsize
                   + 2 * param_bytes)
    vmem_limit = min(64 * 1024 * 1024, max(4 * 1024 * 1024, 2 * int(vmem_needed)))

    return pl.pallas_call(
        kernel,
        out_shape=jax.ShapeDtypeStruct((B, out_dim), out_dtype),
        grid_spec=pltpu.PrefetchScalarGridSpec(
            num_scalar_prefetch=0,
            grid=(grid_m,),
            in_specs=in_specs,
            out_specs=pl.BlockSpec((tile_m, out_dim), lambda i: (i, 0)),
        ),
        compiler_params=pltpu.CompilerParams(
            dimension_semantics=("parallel",),
            vmem_limit_bytes=vmem_limit),
        cost_estimate=cost,
    )(*flat_args)


def init_mlp_params(key, in_dim, out_dim=128, hidden_dim=128, hidden_layers=2,
                    norm_type=None):
    """PyTorch-style init: Linear weights/biases ~ U(-1/sqrt(fan_in), 1/sqrt(fan_in))."""
    dims = [in_dim] + [hidden_dim] * hidden_layers + [out_dim]
    n_lin = hidden_layers + 1
    keys = jax.random.split(key, 2 * n_lin)
    linear = []
    for l in range(n_lin):
        fi, fo = dims[l], dims[l + 1]
        bound = 1.0 / (fi ** 0.5)
        w = jax.random.uniform(keys[2 * l], (fi, fo), jnp.float32, -bound, bound)
        b = jax.random.uniform(keys[2 * l + 1], (fo,), jnp.float32, -bound, bound)
        linear.append((w, b))
    ln = None
    if norm_type == 'LayerNorm':
        ln = (jnp.ones((out_dim,), jnp.float32), jnp.zeros((out_dim,), jnp.float32))
    # TODO(synk): other norm_type values (BatchNorm1d / InstanceNorm1d / Lazy*) not implemented.
    return linear, ln


def mlp_reference(x, linear_params, ln_params=None, last_relu=False):
    """Pure-JAX f32 reference mirroring MLP.forward."""
    h = x
    n = len(linear_params)
    for l, (w, b) in enumerate(linear_params):
        h = h @ w + b
        if l < n - 1 or last_relu:
            h = jnp.maximum(h, 0.0)
    if ln_params is not None:
        g, beta = ln_params
        mu = h.mean(-1, keepdims=True)
        va = ((h - mu) ** 2).mean(-1, keepdims=True)
        h = (h - mu) / jnp.sqrt(va + 1e-5) * g + beta
    return h


if __name__ == "__main__":
    # Module defaults: hidden_dim=128, out_dim=128, hidden_layers=2 (3 Linears).
    B = 1000           # not a multiple of the row tile -> exercises the ragged last block
    IN_DIM = 128
    HIDDEN = 128
    OUT_DIM = 128
    HIDDEN_LAYERS = 2

    key = jax.random.PRNGKey(0)
    kx, kp1, kp2 = jax.random.split(key, 3)
    x = jax.random.normal(kx, (B, IN_DIM), jnp.float32)

    # (a) default MLP: no norm, no last-layer nonlinearity.
    lin_a, ln_a = init_mlp_params(kp1, IN_DIM, OUT_DIM, HIDDEN, HIDDEN_LAYERS,
                                  norm_type=None)
    plin_a, pln_a = prepare_mlp_params(lin_a, ln_a)     # one-time preprocessing
    out_a = jax.block_until_ready(mlp_pallas(x, plin_a, pln_a))
    ref_a = mlp_reference(x, lin_a, ln_a)
    assert out_a.shape == (B, OUT_DIM)
    assert jnp.allclose(out_a, ref_a, atol=5e-2, rtol=5e-2), \
        float(jnp.max(jnp.abs(out_a - ref_a)))

    # (b) MLP with norm_type='LayerNorm' appended.
    lin_b, ln_b = init_mlp_params(kp2, IN_DIM, OUT_DIM, HIDDEN, HIDDEN_LAYERS,
                                  norm_type='LayerNorm')
    plin_b, pln_b = prepare_mlp_params(lin_b, ln_b)
    out_b = jax.block_until_ready(mlp_pallas(x, plin_b, pln_b))
    ref_b = mlp_reference(x, lin_b, ln_b)
    assert out_b.shape == (B, OUT_DIM)
    assert jnp.allclose(out_b, ref_b, atol=5e-2, rtol=5e-2), \
        float(jnp.max(jnp.abs(out_b - ref_b)))

    print("KERNEL_OK")
</pallas_src>

<mosaic_0001>
module attributes {stable_mosaic.version = 11 : i64} {
  func.func @kernel(%arg0: i32, %arg1: memref<512x128xf32, #tpu.memory_space<vmem>>, %arg2: memref<128x128xbf16, #tpu.memory_space<vmem>>, %arg3: memref<1x128xf32, #tpu.memory_space<vmem>>, %arg4: memref<128x128xbf16, #tpu.memory_space<vmem>>, %arg5: memref<1x128xf32, #tpu.memory_space<vmem>>, %arg6: memref<128x128xbf16, #tpu.memory_space<vmem>>, %arg7: memref<1x128xf32, #tpu.memory_space<vmem>>, %arg8: memref<512x128xf32, #tpu.memory_space<vmem>>) attributes {dimension_semantics = [#tpu.dimension_semantics<parallel>], iteration_bounds = array<i64: 2>, scalar_prefetch = 0 : i64, scratch_operands = 0 : i64, tpu.core_type = #tpu.core_type<tc>, window_params = [{transform_indices = @transform_0, window_bounds = array<i64: 512, 128>}, {pipeline_mode = #tpu.pipeline_mode<synchronous>, transform_indices = @transform_1, window_bounds = array<i64: 128, 128>}, {pipeline_mode = #tpu.pipeline_mode<synchronous>, transform_indices = @transform_2, window_bounds = array<i64: 1, 128>}, {pipeline_mode = #tpu.pipeline_mode<synchronous>, transform_indices = @transform_3, window_bounds = array<i64: 128, 128>}, {pipeline_mode = #tpu.pipeline_mode<synchronous>, transform_indices = @transform_4, window_bounds = array<i64: 1, 128>}, {pipeline_mode = #tpu.pipeline_mode<synchronous>, transform_indices = @transform_5, window_bounds = array<i64: 128, 128>}, {pipeline_mode = #tpu.pipeline_mode<synchronous>, transform_indices = @transform_6, window_bounds = array<i64: 1, 128>}, {transform_indices = @transform_7, window_bounds = array<i64: 512, 128>}]} {
    %c0 = arith.constant 0 : index
    %c0_0 = arith.constant 0 : index
    %0 = vector.load %arg1[%c0, %c0_0] : memref<512x128xf32, #tpu.memory_space<vmem>>, vector<512x128xf32>
    %1 = arith.truncf %0 : vector<512x128xf32> to vector<512x128xbf16>
    %c0_1 = arith.constant 0 : index
    %c0_2 = arith.constant 0 : index
    %2 = vector.load %arg2[%c0_1, %c0_2] : memref<128x128xbf16, #tpu.memory_space<vmem>>, vector<128x128xbf16>
    %c0_3 = arith.constant 0 : index
    %c0_4 = arith.constant 0 : index
    %3 = vector.load %arg3[%c0_3, %c0_4] : memref<1x128xf32, #tpu.memory_space<vmem>>, vector<1x128xf32>
    %cst = arith.constant dense<0.000000e+00> : vector<512x128xf32>
    %4 = tpu.matmul %1, %2, %cst {dimension_numbers = #tpu.dot_dimension_numbers<[1], [0], [0], [1], [0, 0, 1, 1], [], []>} : vector<512x128xbf16>, vector<128x128xbf16>, vector<512x128xf32> -> vector<512x128xf32>
    %5 = vector.broadcast %3 : vector<1x128xf32> to vector<512x128xf32>
    %6 = arith.addf %4, %5 : vector<512x128xf32>
    %cst_5 = arith.constant 0.000000e+00 : f32
    %7 = vector.broadcast %cst_5 : f32 to vector<512x128xf32>
    %8 = arith.maximumf %6, %7 : vector<512x128xf32>
    %9 = arith.truncf %8 : vector<512x128xf32> to vector<512x128xbf16>
    %c0_6 = arith.constant 0 : index
    %c0_7 = arith.constant 0 : index
    %10 = vector.load %arg4[%c0_6, %c0_7] : memref<128x128xbf16, #tpu.memory_space<vmem>>, vector<128x128xbf16>
    %c0_8 = arith.constant 0 : index
    %c0_9 = arith.constant 0 : index
    %11 = vector.load %arg5[%c0_8, %c0_9] : memref<1x128xf32, #tpu.memory_space<vmem>>, vector<1x128xf32>
    %cst_10 = arith.constant dense<0.000000e+00> : vector<512x128xf32>
    %12 = tpu.matmul %9, %10, %cst_10 {dimension_numbers = #tpu.dot_dimension_numbers<[1], [0], [0], [1], [0, 0, 1, 1], [], []>} : vector<512x128xbf16>, vector<128x128xbf16>, vector<512x128xf32> -> vector<512x128xf32>
    %13 = vector.broadcast %11 : vector<1x128xf32> to vector<512x128xf32>
    %14 = arith.addf %12, %13 : vector<512x128xf32>
    %cst_11 = arith.constant 0.000000e+00 : f32
    %15 = vector.broadcast %cst_11 : f32 to vector<512x128xf32>
    %16 = arith.maximumf %14, %15 : vector<512x128xf32>
    %17 = arith.truncf %16 : vector<512x128xf32> to vector<512x128xbf16>
    %c0_12 = arith.constant 0 : index
    %c0_13 = arith.constant 0 : index
    %18 = vector.load %arg6[%c0_12, %c0_13] : memref<128x128xbf16, #tpu.memory_space<vmem>>, vector<128x128xbf16>
    %c0_14 = arith.constant 0 : index
    %c0_15 = arith.constant 0 : index
    %19 = vector.load %arg7[%c0_14, %c0_15] : memref<1x128xf32, #tpu.memory_space<vmem>>, vector<1x128xf32>
    %cst_16 = arith.constant dense<0.000000e+00> : vector<512x128xf32>
    %20 = tpu.matmul %17, %18, %cst_16 {dimension_numbers = #tpu.dot_dimension_numbers<[1], [0], [0], [1], [0, 0, 1, 1], [], []>} : vector<512x128xbf16>, vector<128x128xbf16>, vector<512x128xf32> -> vector<512x128xf32>
    %21 = vector.broadcast %19 : vector<1x128xf32> to vector<512x128xf32>
    %22 = arith.addf %20, %21 : vector<512x128xf32>
    %c0_17 = arith.constant 0 : index
    %c0_18 = arith.constant 0 : index
    %23 = vector.load %arg8[%c0_17, %c0_18] : memref<512x128xf32, #tpu.memory_space<vmem>>, vector<512x128xf32>
    tpu.vector_store %arg8[%c0_17, %c0_18], %22 {strides = array<i32>} : memref<512x128xf32, #tpu.memory_space<vmem>>, vector<512x128xf32>,
    return
  }
  func.func @transform_0(%arg0: i32) -> (i32, i32) {
    %c0_i32 = arith.constant 0 : i32
    %c0_i32_0 = arith.constant 0 : i32
    return %arg0, %c0_i32 : i32, i32
  }
  func.func @transform_1(%arg0: i32) -> (i32, i32) {
    %c0_i32 = arith.constant 0 : i32
    %c0_i32_0 = arith.constant 0 : i32
    %c0_i32_1 = arith.constant 0 : i32
    return %c0_i32, %c0_i32_0 : i32, i32
  }
  func.func @transform_2(%arg0: i32) -> (i32, i32) {
    %c0_i32 = arith.constant 0 : i32
    %c0_i32_0 = arith.constant 0 : i32
    %c0_i32_1 = arith.constant 0 : i32
    return %c0_i32, %c0_i32_0 : i32, i32
  }
  func.func @transform_3(%arg0: i32) -> (i32, i32) {
    %c0_i32 = arith.constant 0 : i32
    %c0_i32_0 = arith.constant 0 : i32
    %c0_i32_1 = arith.constant 0 : i32
    return %c0_i32, %c0_i32_0 : i32, i32
  }
  func.func @transform_4(%arg0: i32) -> (i32, i32) {
    %c0_i32 = arith.constant 0 : i32
    %c0_i32_0 = arith.constant 0 : i32
    %c0_i32_1 = arith.constant 0 : i32
    return %c0_i32, %c0_i32_0 : i32, i32
  }
  func.func @transform_5(%arg0: i32) -> (i32, i32) {
    %c0_i32 = arith.constant 0 : i32
    %c0_i32_0 = arith.constant 0 : i32
    %c0_i32_1 = arith.constant 0 : i32
    return %c0_i32, %c0_i32_0 : i32, i32
  }
  func.func @transform_6(%arg0: i32) -> (i32, i32) {
    %c0_i32 = arith.constant 0 : i32
    %c0_i32_0 = arith.constant 0 : i32
    %c0_i32_1 = arith.constant 0 : i32
    return %c0_i32, %c0_i32_0 : i32, i32
  }
  func.func @transform_7(%arg0: i32) -> (i32, i32) {
    %c0_i32 = arith.constant 0 : i32
    %c0_i32_0 = arith.constant 0 : i32
    return %arg0, %c0_i32 : i32, i32
  }
}

</mosaic_0001>

<llo_original>
// kernel: tpu_custom_call.1
$region0: #{tpu_custom_call.1}
  #allocation0 [shape = 'u32[]', space=smem, size = 0x4, offset = 0x4, fixed_abs, tag = 'smem constant byte address 0x4 - core index']
  #allocation1 [shape = 'u32[144,128]{1,0:T(1,128)}', space=vmem, size = 0x12000, scoped, tag = 'internal scratch']
  %s0 = inlined_call_operand.hbm [shape: f32[1000,128], index: 0, kind: input, shape index: {}]
  %s1 = inlined_call_operand.hbm [shape: bf16[128,128], index: 1, kind: input, shape index: {}]
  %s2 = inlined_call_operand.vmem [shape: f32[1,128], index: 2, kind: input, shape index: {}]
  %s3 = inlined_call_operand.hbm [shape: bf16[128,128], index: 3, kind: input, shape index: {}]
  %s4 = inlined_call_operand.vmem [shape: f32[1,128], index: 4, kind: input, shape index: {}]
  %s5 = inlined_call_operand.hbm [shape: bf16[128,128], index: 5, kind: input, shape index: {}]
  %s6 = inlined_call_operand.vmem [shape: f32[1,128], index: 6, kind: input, shape index: {}]
  %s7 = inlined_call_operand.hbm [shape: f32[1000,128], index: 7, kind: output, shape index: {}]
  %s8 = sld [smem:[#allocation0]]
  $region77: #{tpu_custom_call.1} parent=0
    _
  %s10 = ssub.s32 1, %s8
  %s11 = scalar_select 0, %s10, %s8
  $region1: #{tpu_custom_call.1} parent=0
    #allocation2 [shape = 'u8[524288]{0}', space=vmem, size = 0x80000, scoped, tag = 'input window, operand 0']
    #allocation3 [shape = 's32[2]{0}', space=sflag, size = 0x8, scoped, tag = 'scoped memory for tpu_custom_call.1']
    #allocation4 [shape = 's32[2]{0}', space=sflag, size = 0x8, scoped, tag = 'scoped memory for tpu_custom_call.1']
    #allocation5 [shape = 'u8[32768]{0}', space=vmem, size = 0x8000, scoped, tag = 'input window, operand 1, single buffered']
    #allocation6 [shape = 's32[1]{0}', space=sflag, size = 0x4, scoped, tag = 'scoped memory for tpu_custom_call.1']
    #allocation7 [shape = 'u8[32768]{0}', space=vmem, size = 0x8000, scoped, tag = 'input window, operand 3, single buffered']
    #allocation8 [shape = 'u8[32768]{0}', space=vmem, size = 0x8000, scoped, tag = 'input window, operand 5, single buffered']
    #allocation9 [shape = 's32[1]{0}', space=sflag, size = 0x4, scoped, tag = 'scoped memory for tpu_custom_call.1']
    #allocation10 [shape = 'u8[524288]{0}', space=vmem, size = 0x80000, scoped, tag = 'output window, operand 0']
    %12 = vsyncpa [#allocation3], 0
    %s13 = scalar_lea.sflag [#allocation3], 1
    %14 = vsyncpa %s13, 0
    %15 = vsyncpa [#allocation6], 0
    %16 = vsyncpa [#allocation9], 0
    %17 = vsyncpa [#allocation4], 0
    %s18 = scalar_lea.sflag [#allocation4], 1
    %19 = vsyncpa %s18, 0
    loop: start=0, step=1, limit=4
    $region2: #{tpu_custom_call.1} parent=1 // loop_pre_header
      _
    $region3: #{tpu_custom_call.1} parent=1 // loop_header
      %s21 = sphi 0, %s25
      %p22 = scmp.ge.s32.totalorder %s21, 4
      %s31 = sphi 0, %s33
      %s34 = sphi 0, %s31
      %s35 = sphi 0, %s34
      %s51 = sphi 0, %s35
      %s55 = sphi 0, %s55
      %s57 = sphi 0, %s55
      %s58 = sphi 0, %s57
      %s72 = sphi 0, %s58
      %s76 = sphi 0, %s76
      %s78 = sphi 0, %s76
      %s79 = sphi 0, %s78
      %s93 = sphi 0, %s79
      %s97 = sphi 0, %s97
      %s99 = sphi 0, %s97
      %s100 = sphi 0, %s99
      %s114 = sphi 0, %s100
      %s118 = sphi 0, %s118
      %s120 = sphi 0, %s118
      %s121 = sphi 0, %s120
      %s135 = sphi 0, %s121
      %s139 = sphi 0, %s139
      %s141 = sphi 0, %s139
      %s142 = sphi 0, %s141
      %s156 = sphi 0, %s142
      %s160 = sphi 0, %s160
      %s162 = sphi 0, %s160
      %s163 = sphi 0, %s162
      %s177 = sphi 0, %s163
      %s183 = sphi 0, %s185
      %s186 = sphi 0, %s183
      %s187 = sphi 0, %s186
      %s203 = sphi 0, %s187
    $region4: #{tpu_custom_call.1} parent=1 // loop_header_branch
      %24 = sbr.rel (%p22) target = $region8
    $region5: #{tpu_custom_call.1} parent=1 // loop_body
      %s26 = ssub.s32 %s21, 1
      %s27 = ssub.s32 %s21, 2
      %s28 = sadd.s32 %s21, 1
      %s29 = ssub.s32 %s21, %s28
      %p30 = scmp.eq.s32.totalorder %s29, 0
      %s32 = sadd.s32 %s31, 1
      %s33 = scalar_select %p30, %s31, %s32
      %p36 = pneg %p30
      %p37 = scmp.eq.s32.totalorder %s21, 1
      %p38 = por %p36, %p37
      %p39 = scmp.ne.s32.totalorder %s31, %s34
      %p40 = scmp.eq.s32.totalorder %s21, 0
      %p41 = por %p39, %p40
      %p42 = scmp.ne.s32.totalorder %s31, %s34
      %p43 = scmp.eq.s32.totalorder %s26, 1
      %p44 = por %p42, %p43
      %p45 = scmp.ne.s32.totalorder %s34, %s35
      %p46 = scmp.eq.s32.totalorder %s26, 0
      %p47 = por %p45, %p46
      %p48 = scmp.ne.s32.totalorder %s34, %s35
      %p49 = scmp.eq.s32.totalorder %s27, 1
      %p50 = por %p48, %p49
      %p52 = scmp.ne.s32.totalorder %s35, %s51
      %p53 = scmp.eq.s32.totalorder %s27, 0
      %p54 = por %p52, %p53
      %s56 = sadd.s32 %s55, 1
      %p59 = scmp.eq.s32.totalorder %s21, 1
      %p60 = scmp.ne.s32.totalorder %s55, %s57
      %p61 = scmp.eq.s32.totalorder %s21, 0
      %p62 = por %p60, %p61
      %p63 = scmp.ne.s32.totalorder %s55, %s57
      %p64 = scmp.eq.s32.totalorder %s26, 1
      %p65 = por %p63, %p64
      %p66 = scmp.ne.s32.totalorder %s57, %s58
      %p67 = scmp.eq.s32.totalorder %s26, 0
      %p68 = por %p66, %p67
      %p69 = scmp.ne.s32.totalorder %s57, %s58
      %p70 = scmp.eq.s32.totalorder %s27, 1
      %p71 = por %p69, %p70
      %p73 = scmp.ne.s32.totalorder %s58, %s72
      %p74 = scmp.eq.s32.totalorder %s27, 0
      %p75 = por %p73, %p74
      %s77 = sadd.s32 %s76, 1
      %p80 = scmp.eq.s32.totalorder %s21, 1
      %p81 = scmp.ne.s32.totalorder %s76, %s78
      %p82 = scmp.eq.s32.totalorder %s21, 0
      %p83 = por %p81, %p82
      %p84 = scmp.ne.s32.totalorder %s76, %s78
      %p85 = scmp.eq.s32.totalorder %s26, 1
      %p86 = por %p84, %p85
      %p87 = scmp.ne.s32.totalorder %s78, %s79
      %p88 = scmp.eq.s32.totalorder %s26, 0
      %p89 = por %p87, %p88
      %p90 = scmp.ne.s32.totalorder %s78, %s79
      %p91 = scmp.eq.s32.totalorder %s27, 1
      %p92 = por %p90, %p91
      %p94 = scmp.ne.s32.totalorder %s79, %s93
      %p95 = scmp.eq.s32.totalorder %s27, 0
      %p96 = por %p94, %p95
      %s98 = sadd.s32 %s97, 1
      %p101 = scmp.eq.s32.totalorder %s21, 1
      %p102 = scmp.ne.s32.totalorder %s97, %s99
      %p103 = scmp.eq.s32.totalorder %s21, 0
      %p104 = por %p102, %p103
      %p105 = scmp.ne.s32.totalorder %s97, %s99
      %p106 = scmp.eq.s32.totalorder %s26, 1
      %p107 = por %p105, %p106
      %p108 = scmp.ne.s32.totalorder %s99, %s100
      %p109 = scmp.eq.s32.totalorder %s26, 0
      %p110 = por %p108, %p109
      %p111 = scmp.ne.s32.totalorder %s99, %s100
      %p112 = scmp.eq.s32.totalorder %s27, 1
      %p113 = por %p111, %p112
      %p115 = scmp.ne.s32.totalorder %s100, %s114
      %p116 = scmp.eq.s32.totalorder %s27, 0
      %p117 = por %p115, %p116
      %s119 = sadd.s32 %s118, 1
      %p122 = scmp.eq.s32.totalorder %s21, 1
      %p123 = scmp.ne.s32.totalorder %s118, %s120
      %p124 = scmp.eq.s32.totalorder %s21, 0
      %p125 = por %p123, %p124
      %p126 = scmp.ne.s32.totalorder %s118, %s120
      %p127 = scmp.eq.s32.totalorder %s26, 1
      %p128 = por %p126, %p127
      %p129 = scmp.ne.s32.totalorder %s120, %s121
      %p130 = scmp.eq.s32.totalorder %s26, 0
      %p131 = por %p129, %p130
      %p132 = scmp.ne.s32.totalorder %s120, %s121
      %p133 = scmp.eq.s32.totalorder %s27, 1
      %p134 = por %p132, %p133
      %p136 = scmp.ne.s32.totalorder %s121, %s135
      %p137 = scmp.eq.s32.totalorder %s27, 0
      %p138 = por %p136, %p137
      %s140 = sadd.s32 %s139, 1
      %p143 = scmp.eq.s32.totalorder %s21, 1
      %p144 = scmp.ne.s32.totalorder %s139, %s141
      %p145 = scmp.eq.s32.totalorder %s21, 0
      %p146 = por %p144, %p145
      %p147 = scmp.ne.s32.totalorder %s139, %s141
      %p148 = scmp.eq.s32.totalorder %s26, 1
      %p149 = por %p147, %p148
      %p150 = scmp.ne.s32.totalorder %s141, %s142
      %p151 = scmp.eq.s32.totalorder %s26, 0
      %p152 = por %p150, %p151
      %p153 = scmp.ne.s32.totalorder %s141, %s142
      %p154 = scmp.eq.s32.totalorder %s27, 1
      %p155 = por %p153, %p154
      %p157 = scmp.ne.s32.totalorder %s142, %s156
      %p158 = scmp.eq.s32.totalorder %s27, 0
      %p159 = por %p157, %p158
      %s161 = sadd.s32 %s160, 1
      %p164 = scmp.eq.s32.totalorder %s21, 1
      %p165 = scmp.ne.s32.totalorder %s160, %s162
      %p166 = scmp.eq.s32.totalorder %s21, 0
      %p167 = por %p165, %p166
      %p168 = scmp.ne.s32.totalorder %s160, %s162
      %p169 = scmp.eq.s32.totalorder %s26, 1
      %p170 = por %p168, %p169
      %p171 = scmp.ne.s32.totalorder %s162, %s163
      %p172 = scmp.eq.s32.totalorder %s26, 0
      %p173 = por %p171, %p172
      %p174 = scmp.ne.s32.totalorder %s162, %s163
      %p175 = scmp.eq.s32.totalorder %s27, 1
      %p176 = por %p174, %p175
      %p178 = scmp.ne.s32.totalorder %s163, %s177
      %p179 = scmp.eq.s32.totalorder %s27, 0
      %p180 = por %p178, %p179
      %s181 = ssub.s32 %s21, %s28
      %p182 = scmp.eq.s32.totalorder %s181, 0
      %s184 = sadd.s32 %s183, 1
      %s185 = scalar_select %p182, %s183, %s184
      %p188 = pneg %p182
      %p189 = scmp.eq.s32.totalorder %s21, 1
      %p190 = por %p188, %p189
      %p191 = scmp.ne.s32.totalorder %s183, %s186
      %p192 = scmp.eq.s32.totalorder %s21, 0
      %p193 = por %p191, %p192
      %p194 = scmp.ne.s32.totalorder %s183, %s186
      %p195 = scmp.eq.s32.totalorder %s26, 1
      %p196 = por %p194, %p195
      %p197 = scmp.ne.s32.totalorder %s186, %s187
      %p198 = scmp.eq.s32.totalorder %s26, 0
      %p199 = por %p197, %p198
      %p200 = scmp.ne.s32.totalorder %s186, %s187
      %p201 = scmp.eq.s32.totalorder %s27, 1
      %p202 = por %p200, %p201
      %p204 = scmp.ne.s32.totalorder %s187, %s203
      %p205 = scmp.eq.s32.totalorder %s27, 0
      %p206 = por %p204, %p205
      %p207 = scmp.le.s32.totalorder 1, %s21
      %p208 = scmp.lt.s32.totalorder %s21, 3
      %p209 = pnand %p207, %p208
      %p210 = pneg %p209
      // Predicated region
      $region9: #{tpu_custom_call.1} parent=5 // pred_check
        _
      $region10: #{tpu_custom_call.1} parent=5 // pred_check_branch
        %212 = sbr.rel (%p209) target = $region12
      $region11: #{tpu_custom_call.1} parent=5 // pred_region
        %s213 = ssub.s32 %s21, 1
        // Predicated region
        $region13: #{tpu_custom_call.1} parent=11 // pred_check
          %p214 = pneg %p68
        $region14: #{tpu_custom_call.1} parent=11 // pred_check_branch
          %216 = sbr.rel (%p214) target = $region16
        $region15: #{tpu_custom_call.1} parent=11 // pred_region
          %s218 = ssub.s32 1024, 1024
          %219 = vsyncadd [#allocation6], %s218
          %s220 = sshll.u32 [#allocation5], 4
          %s221 = int_to_ptr.vmem [resolvable:$true] %s220
          %226 = dma.hbm_to_vmem [thread:$0]  %s1, 1024, %s221, [#allocation6], 64, 64, 4
        $region16: #{tpu_custom_call.1} parent=11 // pred_fallthru
          _
        // Predicated region
        $region17: #{tpu_custom_call.1} parent=11 // pred_check
          %p227 = pneg %p89
        $region18: #{tpu_custom_call.1} parent=11 // pred_check_branch
          %229 = sbr.rel (%p227) target = $region20
        $region19: #{tpu_custom_call.1} parent=11 // pred_region
          _
        $region20: #{tpu_custom_call.1} parent=11 // pred_fallthru
          _
        // Predicated region
        $region21: #{tpu_custom_call.1} parent=11 // pred_check
          %p230 = pneg %p110
        $region22: #{tpu_custom_call.1} parent=11 // pred_check_branch
          %232 = sbr.rel (%p230) target = $region24
        $region23: #{tpu_custom_call.1} parent=11 // pred_region
          %s234 = ssub.s32 1024, 1024
          %235 = vsyncadd [#allocation6], %s234
          %s236 = sshll.u32 [#allocation7], 4
          %s237 = int_to_ptr.vmem [resolvable:$true] %s236
          %242 = dma.hbm_to_vmem [thread:$0]  %s3, 1024, %s237, [#allocation6], 64, 64, 4
        $region24: #{tpu_custom_call.1} parent=11 // pred_fallthru
          _
        // Predicated region
        $region25: #{tpu_custom_call.1} parent=11 // pred_check
          %p243 = pneg %p131
        $region26: #{tpu_custom_call.1} parent=11 // pred_check_branch
          %245 = sbr.rel (%p243) target = $region28
        $region27: #{tpu_custom_call.1} parent=11 // pred_region
          _
        $region28: #{tpu_custom_call.1} parent=11 // pred_fallthru
          _
        // Predicated region
        $region29: #{tpu_custom_call.1} parent=11 // pred_check
          %p246 = pneg %p152
        $region30: #{tpu_custom_call.1} parent=11 // pred_check_branch
          %248 = sbr.rel (%p246) target = $region32
        $region31: #{tpu_custom_call.1} parent=11 // pred_region
          %s250 = ssub.s32 1024, 1024
          %251 = vsyncadd [#allocation9], %s250
          %s252 = sshll.u32 [#allocation8], 4
          %s253 = int_to_ptr.vmem [resolvable:$true] %s252
          %258 = dma.hbm_to_vmem [thread:$0]  %s5, 1024, %s253, [#allocation9], 64, 64, 4
        $region32: #{tpu_custom_call.1} parent=11 // pred_fallthru
          _
        // Predicated region
        $region33: #{tpu_custom_call.1} parent=11 // pred_check
          %p259 = pneg %p173
        $region34: #{tpu_custom_call.1} parent=11 // pred_check_branch
          %261 = sbr.rel (%p259) target = $region36
        $region35: #{tpu_custom_call.1} parent=11 // pred_region
          _
        $region36: #{tpu_custom_call.1} parent=11 // pred_fallthru
          _
      $region12: #{tpu_custom_call.1} parent=5 // pred_fallthru
        _
      %p262 = scmp.lt.s32.totalorder %s21, 2
      // Predicated region
      $region37: #{tpu_custom_call.1} parent=5 // pred_check
        %p263 = pneg %p262
      $region38: #{tpu_custom_call.1} parent=5 // pred_check_branch
        %265 = sbr.rel (%p263) target = $region40
      $region39: #{tpu_custom_call.1} parent=5 // pred_region
        // Predicated region
        $region41: #{tpu_custom_call.1} parent=39 // pred_check
          %p266 = pneg %p41
        $region42: #{tpu_custom_call.1} parent=39 // pred_check_branch
          %268 = sbr.rel (%p266) target = $region44
        $region43: #{tpu_custom_call.1} parent=39 // pred_region
          %s269 = sand.u32 %s31, 1
          %s270 = scalar_lea.sflag [#allocation3], %s269
          %s271 = sand.u32 %s31, 1
          %s272 = smul.addr %s271, 512
          %s273 = scalar_lea.vmem [#allocation2], %s272
          %s274 = smul.u32 64, %s21
          %s275 = ssub.s32 125, %s274
          %p276 = scmp.lt.s32.totalorder %s275, 64
          %s277 = scalar_select %p276, %s275, 64
          %s278 = smul.u32 128, %s277
          %s280 = ssub.s32 8192, %s278
          %281 = vsyncadd %s270, %s280
          %p282 = scmp.ne.s32.totalorder 0, %s278
          %s283 = smul.addr %s274, 128
          %s284 = scalar_lea.hbm %s0, %s283
          %s285 = smul.u32 8, %s277
          %s286 = sshll.u32 %s273, 4
          %s287 = int_to_ptr.vmem [resolvable:$true] %s286
          %s288 = sshll.u32 %s285, 4
          %292 = dma.hbm_to_vmem [thread:$0]  (%p282), %s284, %s288, %s287, %s270, 128, 128, 8
        $region44: #{tpu_custom_call.1} parent=39 // pred_fallthru
          _
      $region40: #{tpu_custom_call.1} parent=5 // pred_fallthru
        _
      %p293 = scmp.le.s32.totalorder 1, %s21
      %p294 = scmp.lt.s32.totalorder %s21, 3
      %p295 = pnand %p293, %p294
      %p296 = pneg %p295
      // Predicated region
      $region45: #{tpu_custom_call.1} parent=5 // pred_check
        _
      $region46: #{tpu_custom_call.1} parent=5 // pred_check_branch
        %298 = sbr.rel (%p295) target = $region48
      $region47: #{tpu_custom_call.1} parent=5 // pred_region
        %s299 = ssub.s32 %s21, 1
        %s300 = sand.u32 %s34, 1
        %s301 = scalar_lea.sflag [#allocation3], %s300
        %s302 = sand.u32 %s34, 1
        %s303 = smul.addr %s302, 512
        %s304 = scalar_lea.vmem [#allocation2], %s303
        // Predicated region
        $region49: #{tpu_custom_call.1} parent=47 // pred_check
          %p305 = pneg %p47
        $region50: #{tpu_custom_call.1} parent=47 // pred_check_branch
          %307 = sbr.rel (%p305) target = $region52
        $region51: #{tpu_custom_call.1} parent=47 // pred_region
          %308 = dma.done %s301, 8192
        $region52: #{tpu_custom_call.1} parent=47 // pred_fallthru
          _
        // Predicated region
        $region53: #{tpu_custom_call.1} parent=47 // pred_check
          %p309 = pneg %p68
        $region54: #{tpu_custom_call.1} parent=47 // pred_check_branch
          %311 = sbr.rel (%p309) target = $region56
        $region55: #{tpu_custom_call.1} parent=47 // pred_region
          %312 = dma.done [#allocation6], 1024
        $region56: #{tpu_custom_call.1} parent=47 // pred_fallthru
          _
        // Predicated region
        $region57: #{tpu_custom_call.1} parent=47 // pred_check
          %p313 = pneg %p110
        $region58: #{tpu_custom_call.1} parent=47 // pred_check_branch
          %315 = sbr.rel (%p313) target = $region60
        $region59: #{tpu_custom_call.1} parent=47 // pred_region
          %316 = dma.done [#allocation6], 1024
        $region60: #{tpu_custom_call.1} parent=47 // pred_fallthru
          _
        // Predicated region
        $region61: #{tpu_custom_call.1} parent=47 // pred_check
          %p317 = pneg %p152
        $region62: #{tpu_custom_call.1} parent=47 // pred_check_branch
          %319 = sbr.rel (%p317) target = $region64
        $region63: #{tpu_custom_call.1} parent=47 // pred_region
          %320 = dma.done [#allocation9], 1024
        $region64: #{tpu_custom_call.1} parent=47 // pred_fallthru
          _
        %s321 = sand.u32 %s34, 1
        %s322 = scalar_lea.sflag [#allocation3], %s321
        %s323 = sand.u32 %s34, 1
        %s324 = smul.addr %s323, 512
        %s325 = scalar_lea.vmem [#allocation2], %s324
        %p326 = pneg %p47
        %p327 = pneg %p44
        %p328 = pneg %p68
        %p329 = pneg %p65
        %p330 = pneg %p89
        %p331 = pneg %p86
        %p332 = pneg %p110
        %p333 = pneg %p107
        %p334 = pneg %p131
        %p335 = pneg %p128
        %p336 = pneg %p152
        %p337 = pneg %p149
        %p338 = pneg %p173
        %p339 = pneg %p170
        %p340 = pneg %p199
        %p341 = pneg %p196
        %s342 = sand.u32 %s186, 1
        %s343 = scalar_lea.sflag [#allocation4], %s342
        %s344 = sand.u32 %s186, 1
        %s345 = smul.addr %s344, 512
        %s346 = scalar_lea.vmem [#allocation10], %s345
        %s347 = smul.u32 64, %s26
        %s348 = ssub.s32 125, %s347
        %p349 = scmp.lt.s32.totalorder %s348, 64
        %s350 = scalar_select %p349, %s348, 64
        %s351 = smul.u32 128, %s350
        %s352 = smul.u32 64, %s26
        %s353 = ssub.s32 125, %s352
        %p354 = scmp.lt.s32.totalorder %s353, 64
        %s355 = scalar_select %p354, %s353, 64
        %s356 = smul.u32 128, %s355
        %v358 = vld [vmem:[%s304] sm:$0xff]
        %v359 = vld [vmem:[%s304 + $0x8] sm:$0xff]
        %v360 = vld [vmem:[%s304 + $0x10] sm:$0xff]
        %v361 = vld [vmem:[%s304 + $0x18] sm:$0xff]
        %v362 = vld [vmem:[%s304 + $0x20] sm:$0xff]
        %v363 = vld [vmem:[%s304 + $0x28] sm:$0xff]
        %v364 = vld [vmem:[%s304 + $0x30] sm:$0xff]
        %v365 = vld [vmem:[%s304 + $0x38] sm:$0xff]
        %v366 = vld [vmem:[%s304 + $0x40] sm:$0xff]
        %v367 = vld [vmem:[%s304 + $0x48] sm:$0xff]
        %v368 = vld [vmem:[%s304 + $0x50] sm:$0xff]
        %v369 = vld [vmem:[%s304 + $0x58] sm:$0xff]
        %v370 = vld [vmem:[%s304 + $0x60] sm:$0xff]
        %v371 = vld [vmem:[%s304 + $0x68] sm:$0xff]
        %v372 = vld [vmem:[%s304 + $0x70] sm:$0xff]
        %v373 = vld [vmem:[%s304 + $0x78] sm:$0xff]
        %v374 = vld [vmem:[%s304 + $0x80] sm:$0xff]
        %v375 = vld [vmem:[%s304 + $0x88] sm:$0xff]
        %v376 = vld [vmem:[%s304 + $0x90] sm:$0xff]
        %v377 = vld [vmem:[%s304 + $0x98] sm:$0xff]
        %v378 = vld [vmem:[%s304 + $0xa0] sm:$0xff]
        %v379 = vld [vmem:[%s304 + $0xa8] sm:$0xff]
        %v380 = vld [vmem:[%s304 + $0xb0] sm:$0xff]
        %v381 = vld [vmem:[%s304 + $0xb8] sm:$0xff]
        %v382 = vld [vmem:[%s304 + $0xc0] sm:$0xff]
        %v383 = vld [vmem:[%s304 + $0xc8] sm:$0xff]
        %v384 = vld [vmem:[%s304 + $0xd0] sm:$0xff]
        %v385 = vld [vmem:[%s304 + $0xd8] sm:$0xff]
        %v386 = vld [vmem:[%s304 + $0xe0] sm:$0xff]
        %v387 = vld [vmem:[%s304 + $0xe8] sm:$0xff]
        %v388 = vld [vmem:[%s304 + $0xf0] sm:$0xff]
        %v389 = vld [vmem:[%s304 + $0xf8] sm:$0xff]
        %v390 = vld [vmem:[%s304 + $0x100] sm:$0xff]
        %v391 = vld [vmem:[%s304 + $0x108] sm:$0xff]
        %v392 = vld [vmem:[%s304 + $0x110] sm:$0xff]
        %v393 = vld [vmem:[%s304 + $0x118] sm:$0xff]
        %v394 = vld [vmem:[%s304 + $0x120] sm:$0xff]
        %v395 = vld [vmem:[%s304 + $0x128] sm:$0xff]
        %v396 = vld [vmem:[%s304 + $0x130] sm:$0xff]
        %v397 = vld [vmem:[%s304 + $0x138] sm:$0xff]
        %v398 = vld [vmem:[%s304 + $0x140] sm:$0xff]
        %v399 = vld [vmem:[%s304 + $0x148] sm:$0xff]
        %v400 = vld [vmem:[%s304 + $0x150] sm:$0xff]
        %v401 = vld [vmem:[%s304 + $0x158] sm:$0xff]
        %v402 = vld [vmem:[%s304 + $0x160] sm:$0xff]
        %v403 = vld [vmem:[%s304 + $0x168] sm:$0xff]
        %v404 = vld [vmem:[%s304 + $0x170] sm:$0xff]
        %v405 = vld [vmem:[%s304 + $0x178] sm:$0xff]
        %v406 = vld [vmem:[%s304 + $0x180] sm:$0xff]
        %v407 = vld [vmem:[%s304 + $0x188] sm:$0xff]
        %v408 = vld [vmem:[%s304 + $0x190] sm:$0xff]
        %v409 = vld [vmem:[%s304 + $0x198] sm:$0xff]
        %v410 = vld [vmem:[%s304 + $0x1a0] sm:$0xff]
        %v411 = vld [vmem:[%s304 + $0x1a8] sm:$0xff]
        %v412 = vld [vmem:[%s304 + $0x1b0] sm:$0xff]
        %v413 = vld [vmem:[%s304 + $0x1b8] sm:$0xff]
        %v414 = vld [vmem:[%s304 + $0x1c0] sm:$0xff]
        %v415 = vld [vmem:[%s304 + $0x1c8] sm:$0xff]
        %v416 = vld [vmem:[%s304 + $0x1d0] sm:$0xff]
        %v417 = vld [vmem:[%s304 + $0x1d8] sm:$0xff]
        %v418 = vld [vmem:[%s304 + $0x1e0] sm:$0xff]
        %v419 = vld [vmem:[%s304 + $0x1e8] sm:$0xff]
        %v420 = vld [vmem:[%s304 + $0x1f0] sm:$0xff]
        %v421 = vld [vmem:[%s304 + $0x1f8] sm:$0xff]
        %v422 = vpack.c.bf16 %v359, %v358
        %v423 = vpack.c.bf16 %v361, %v360
        %v424 = vpack.c.bf16 %v363, %v362
        %v425 = vpack.c.bf16 %v365, %v364
        %v426 = vpack.c.bf16 %v367, %v366
        %v427 = vpack.c.bf16 %v369, %v368
        %v428 = vpack.c.bf16 %v371, %v370
        %v429 = vpack.c.bf16 %v373, %v372
        %v430 = vpack.c.bf16 %v375, %v374
        %v431 = vpack.c.bf16 %v377, %v376
        %v432 = vpack.c.bf16 %v379, %v378
        %v433 = vpack.c.bf16 %v381, %v380
        %v434 = vpack.c.bf16 %v383, %v382
        %v435 = vpack.c.bf16 %v385, %v384
        %v436 = vpack.c.bf16 %v387, %v386
        %v437 = vpack.c.bf16 %v389, %v388
        %v438 = vpack.c.bf16 %v391, %v390
        %v439 = vpack.c.bf16 %v393, %v392
        %v440 = vpack.c.bf16 %v395, %v394
        %v441 = vpack.c.bf16 %v397, %v396
        %v442 = vpack.c.bf16 %v399, %v398
        %v443 = vpack.c.bf16 %v401, %v400
        %v444 = vpack.c.bf16 %v403, %v402
        %v445 = vpack.c.bf16 %v405, %v404
        %v446 = vpack.c.bf16 %v407, %v406
        %v447 = vpack.c.bf16 %v409, %v408
        %v448 = vpack.c.bf16 %v411, %v410
        %v449 = vpack.c.bf16 %v413, %v412
        %v450 = vpack.c.bf16 %v415, %v414
        %v451 = vpack.c.bf16 %v417, %v416
        %v452 = vpack.c.bf16 %v419, %v418
        %v453 = vpack.c.bf16 %v421, %v420
        %v454 = vld [vmem:[#allocation5] sm:$0xf]
        %v455 = vld [vmem:[#allocation5 + $0x4] sm:$0xf]
        %v456 = vld [vmem:[#allocation5 + $0x8] sm:$0xf]
        %v457 = vld [vmem:[#allocation5 + $0xc] sm:$0xf]
        %v458 = vld [vmem:[#allocation5 + $0x10] sm:$0xf]
        %v459 = vld [vmem:[#allocation5 + $0x14] sm:$0xf]
        %v460 = vld [vmem:[#allocation5 + $0x18] sm:$0xf]
        %v461 = vld [vmem:[#allocation5 + $0x1c] sm:$0xf]
        %v462 = vld [vmem:[#allocation5 + $0x20] sm:$0xf]
        %v463 = vld [vmem:[#allocation5 + $0x24] sm:$0xf]
        %v464 = vld [vmem:[#allocation5 + $0x28] sm:$0xf]
        %v465 = vld [vmem:[#allocation5 + $0x2c] sm:$0xf]
        %v466 = vld [vmem:[#allocation5 + $0x30] sm:$0xf]
        %v467 = vld [vmem:[#allocation5 + $0x34] sm:$0xf]
        %v468 = vld [vmem:[#allocation5 + $0x38] sm:$0xf]
        %v469 = vld [vmem:[#allocation5 + $0x3c] sm:$0xf]
        %v470 = vld [vmem:[%s2] sm:$0x1]
        %v472 = vlaneseq
        %v473 = vshrl.u32 %v472, 7
        %v474 = vsub.s32 0, %v473
        %v475 = vrot.slane %v470, %v474
        %v493 = vunpack.c.l.b16 %v454
        %v494 = vunpack.c.l.b16 %v455
        %v495 = vunpack.c.l.b16 %v456
        %v496 = vunpack.c.l.b16 %v457
        %v497 = vunpack.c.l.b16 %v458
        %v498 = vunpack.c.l.b16 %v459
        %v499 = vunpack.c.l.b16 %v460
        %v500 = vunpack.c.l.b16 %v461
        %v501 = vunpack.c.l.b16 %v462
        %v502 = vunpack.c.l.b16 %v463
        %v503 = vunpack.c.l.b16 %v464
        %v504 = vunpack.c.l.b16 %v465
        %v505 = vunpack.c.l.b16 %v466
        %v506 = vunpack.c.l.b16 %v467
        %v507 = vunpack.c.l.b16 %v468
        %v508 = vunpack.c.l.b16 %v469
        %v509 = vpack.c.b16 %v494, %v493
        %v510 = vpack.c.b16 %v496, %v495
        %v511 = vpack.c.b16 %v498, %v497
        %v512 = vpack.c.b16 %v500, %v499
        %v513 = vpack.c.b16 %v502, %v501
        %v514 = vpack.c.b16 %v504, %v503
        %v515 = vpack.c.b16 %v506, %v505
        %v516 = vpack.c.b16 %v508, %v507
        %525 = vmatprep.subr.bf16.mxu0 0
        %526 = vmatpush1.bf16.msra.mxu0 %v509
        %527 = vmatprep.subr.bf16.mxu0 0
        %528 = vmatpush1.bf16.msra.mxu0 %v510
        %529 = vmatprep.subr.bf16.mxu0 0
        %530 = vmatpush1.bf16.msra.mxu0 %v511
        %531 = vmatprep.subr.bf16.mxu0 0
        %532 = vmatpush1.bf16.msra.mxu0 %v512
        %533 = vmatprep.subr.bf16.mxu0 0
        %534 = vmatpush1.bf16.msra.mxu0 %v513
        %535 = vmatprep.subr.bf16.mxu0 0
        %536 = vmatpush1.bf16.msra.mxu0 %v514
        %537 = vmatprep.subr.bf16.mxu0 0
        %538 = vmatpush1.bf16.msra.mxu0 %v515
        %539 = vmatprep.subr.bf16.mxu0 0
        %540 = vmatpush1.bf16.msra.mxu0 %v516
        %541 = vmatprep.subr.bf16.mxu0 0
        %542 = vmatpush1.bf16.msra.mxu0 0
        %543 = vmatprep.subr.bf16.mxu0 0
        %544 = vmatpush1.bf16.msra.mxu0 0
        %545 = vmatprep.subr.bf16.mxu0 0
        %546 = vmatpush1.bf16.msra.mxu0 0
        %547 = vmatprep.subr.bf16.mxu0 0
        %548 = vmatpush1.bf16.msra.mxu0 0
        %549 = vmatprep.subr.bf16.mxu0 0
        %550 = vmatpush1.bf16.msra.mxu0 0
        %551 = vmatprep.subr.bf16.mxu0 0
        %552 = vmatpush1.bf16.msra.mxu0 0
        %553 = vmatprep.subr.bf16.mxu0 0
        %554 = vmatpush1.bf16.msra.mxu0 0
        %555 = vmatprep.subr.bf16.mxu0 0
        %556 = vmatpush1.bf16.msra.mxu0 0
        %557 = vmatprep.mubr.bf16.mxu0 0
        %558 = vmatmul.mubr.bf16.gmra.mrb[0].mxu0 %v422
        %v559 = vpop.f32.mrb[0].mxu0
        %v560 = vadd.f32 %v475, %v559
        %v561 = vpop.f32.mrb[0].mxu0
        %v562 = vpop.f32.mrb[0].mxu0
        %v563 = vadd.f32 %v475, %v562
        %v564 = vpop.f32.mrb[0].mxu0
        %565 = vmatprep.mubr.bf16.mxu0 0
        %566 = vmatmul.mubr.bf16.gmra.mrb[0].mxu0 %v423
        %v567 = vpop.f32.mrb[0].mxu0
        %v568 = vadd.f32 %v475, %v567
        %v569 = vpop.f32.mrb[0].mxu0
        %v570 = vpop.f32.mrb[0].mxu0
        %v571 = vadd.f32 %v475, %v570
        %v572 = vpop.f32.mrb[0].mxu0
        %573 = vmatprep.mubr.bf16.mxu0 0
        %574 = vmatmul.mubr.bf16.gmra.mrb[0].mxu0 %v424
        %v575 = vpop.f32.mrb[0].mxu0
        %v576 = vadd.f32 %v475, %v575
        %v577 = vpop.f32.mrb[0].mxu0
        %v578 = vpop.f32.mrb[0].mxu0
        %v579 = vadd.f32 %v475, %v578
        %v580 = vpop.f32.mrb[0].mxu0
        %581 = vmatprep.mubr.bf16.mxu0 0
        %582 = vmatmul.mubr.bf16.gmra.mrb[0].mxu0 %v425
        %v583 = vpop.f32.mrb[0].mxu0
        %v584 = vadd.f32 %v475, %v583
        %v585 = vpop.f32.mrb[0].mxu0
        %v586 = vpop.f32.mrb[0].mxu0
        %v587 = vadd.f32 %v475, %v586
        %v588 = vpop.f32.mrb[0].mxu0
        %589 = vmatprep.mubr.bf16.mxu0 0
        %590 = vmatmul.mubr.bf16.gmra.mrb[0].mxu0 %v426
        %v591 = vpop.f32.mrb[0].mxu0
        %v592 = vadd.f32 %v475, %v591
        %v593 = vpop.f32.mrb[0].mxu0
        %v594 = vpop.f32.mrb[0].mxu0
        %v595 = vadd.f32 %v475, %v594
        %v596 = vpop.f32.mrb[0].mxu0
        %597 = vmatprep.mubr.bf16.mxu0 0
        %598 = vmatmul.mubr.bf16.gmra.mrb[0].mxu0 %v427
        %v599 = vpop.f32.mrb[0].mxu0
        %v600 = vadd.f32 %v475, %v599
        %v601 = vpop.f32.mrb[0].mxu0
        %v602 = vpop.f32.mrb[0].mxu0
        %v603 = vadd.f32 %v475, %v602
        %v604 = vpop.f32.mrb[0].mxu0
        %605 = vmatprep.mubr.bf16.mxu0 0
        %606 = vmatmul.mubr.bf16.gmra.mrb[0].mxu0 %v428
        %v607 = vpop.f32.mrb[0].mxu0
        %v608 = vadd.f32 %v475, %v607
        %v609 = vpop.f32.mrb[0].mxu0
        %v610 = vpop.f32.mrb[0].mxu0
        %v611 = vadd.f32 %v475, %v610
        %v612 = vpop.f32.mrb[0].mxu0
        %613 = vmatprep.mubr.bf16.mxu0 0
        %614 = vmatmul.mubr.bf16.gmra.mrb[0].mxu0 %v429
        %v615 = vpop.f32.mrb[0].mxu0
        %v616 = vadd.f32 %v475, %v615
        %v617 = vpop.f32.mrb[0].mxu0
        %v618 = vpop.f32.mrb[0].mxu0
        %v619 = vadd.f32 %v475, %v618
        %v620 = vpop.f32.mrb[0].mxu0
        %621 = vmatprep.mubr.bf16.mxu0 0
        %622 = vmatmul.mubr.bf16.gmra.mrb[0].mxu0 %v430
        %v623 = vpop.f32.mrb[0].mxu0
        %v624 = vadd.f32 %v475, %v623
        %v625 = vpop.f32.mrb[0].mxu0
        %v626 = vpop.f32.mrb[0].mxu0
        %v627 = vadd.f32 %v475, %v626
        %v628 = vpop.f32.mrb[0].mxu0
        %629 = vmatprep.mubr.bf16.mxu0 0
        %630 = vmatmul.mubr.bf16.gmra.mrb[0].mxu0 %v431
        %v631 = vpop.f32.mrb[0].mxu0
        %v632 = vadd.f32 %v475, %v631
        %v633 = vpop.f32.mrb[0].mxu0
        %v634 = vpop.f32.mrb[0].mxu0
        %v635 = vadd.f32 %v475, %v634
        %v636 = vpop.f32.mrb[0].mxu0
        %637 = vmatprep.mubr.bf16.mxu0 0
        %638 = vmatmul.mubr.bf16.gmra.mrb[0].mxu0 %v432
        %v639 = vpop.f32.mrb[0].mxu0
        %v640 = vadd.f32 %v475, %v639
        %v641 = vpop.f32.mrb[0].mxu0
        %v642 = vpop.f32.mrb[0].mxu0
        %v643 = vadd.f32 %v475, %v642
        %v644 = vpop.f32.mrb[0].mxu0
        %645 = vmatprep.mubr.bf16.mxu0 0
        %646 = vmatmul.mubr.bf16.gmra.mrb[0].mxu0 %v433
        %v647 = vpop.f32.mrb[0].mxu0
        %v648 = vadd.f32 %v475, %v647
        %v649 = vpop.f32.mrb[0].mxu0
        %v650 = vpop.f32.mrb[0].mxu0
        %v651 = vadd.f32 %v475, %v650
        %v652 = vpop.f32.mrb[0].mxu0
        %653 = vmatprep.mubr.bf16.mxu0 0
        %654 = vmatmul.mubr.bf16.gmra.mrb[0].mxu0 %v434
        %v655 = vpop.f32.mrb[0].mxu0
        %v656 = vadd.f32 %v475, %v655
        %v657 = vpop.f32.mrb[0].mxu0
        %v658 = vpop.f32.mrb[0].mxu0
        %v659 = vadd.f32 %v475, %v658
        %v660 = vpop.f32.mrb[0].mxu0
        %661 = vmatprep.mubr.bf16.mxu0 0
        %662 = vmatmul.mubr.bf16.gmra.mrb[0].mxu0 %v435
        %v663 = vpop.f32.mrb[0].mxu0
        %v664 = vadd.f32 %v475, %v663
        %v665 = vpop.f32.mrb[0].mxu0
        %v666 = vpop.f32.mrb[0].mxu0
        %v667 = vadd.f32 %v475, %v666
        %v668 = vpop.f32.mrb[0].mxu0
        %669 = vmatprep.mubr.bf16.mxu0 0
        %670 = vmatmul.mubr.bf16.gmra.mrb[0].mxu0 %v436
        %v671 = vpop.f32.mrb[0].mxu0
        %v672 = vadd.f32 %v475, %v671
        %v673 = vpop.f32.mrb[0].mxu0
        %v674 = vpop.f32.mrb[0].mxu0
        %v675 = vadd.f32 %v475, %v674
        %v676 = vpop.f32.mrb[0].mxu0
        %677 = vmatprep.mubr.bf16.mxu0 0
        %678 = vmatmul.mubr.bf16.gmra.mrb[0].mxu0 %v437
        %v679 = vpop.f32.mrb[0].mxu0
        %v680 = vadd.f32 %v475, %v679
        %v681 = vpop.f32.mrb[0].mxu0
        %v682 = vpop.f32.mrb[0].mxu0
        %v683 = vadd.f32 %v475, %v682
        %v684 = vpop.f32.mrb[0].mxu0
        %685 = vmatprep.mubr.bf16.mxu0 0
        %686 = vmatmul.mubr.bf16.gmra.mrb[0].mxu0 %v438
        %v687 = vpop.f32.mrb[0].mxu0
        %v688 = vadd.f32 %v475, %v687
        %v689 = vpop.f32.mrb[0].mxu0
        %v690 = vpop.f32.mrb[0].mxu0
        %v691 = vadd.f32 %v475, %v690
        %v692 = vpop.f32.mrb[0].mxu0
        %693 = vmatprep.mubr.bf16.mxu0 0
        %694 = vmatmul.mubr.bf16.gmra.mrb[0].mxu0 %v439
        %v695 = vpop.f32.mrb[0].mxu0
        %v696 = vadd.f32 %v475, %v695
        %v697 = vpop.f32.mrb[0].mxu0
        %v698 = vpop.f32.mrb[0].mxu0
        %v699 = vadd.f32 %v475, %v698
        %v700 = vpop.f32.mrb[0].mxu0
        %701 = vmatprep.mubr.bf16.mxu0 0
        %702 = vmatmul.mubr.bf16.gmra.mrb[0].mxu0 %v440
        %v703 = vpop.f32.mrb[0].mxu0
        %v704 = vadd.f32 %v475, %v703
        %v705 = vpop.f32.mrb[0].mxu0
        %v706 = vpop.f32.mrb[0].mxu0
        %v707 = vadd.f32 %v475, %v706
        %v708 = vpop.f32.mrb[0].mxu0
        %709 = vmatprep.mubr.bf16.mxu0 0
        %710 = vmatmul.mubr.bf16.gmra.mrb[0].mxu0 %v441
        %v711 = vpop.f32.mrb[0].mxu0
        %v712 = vadd.f32 %v475, %v711
        %v713 = vpop.f32.mrb[0].mxu0
        %v714 = vpop.f32.mrb[0].mxu0
        %v715 = vadd.f32 %v475, %v714
        %v716 = vpop.f32.mrb[0].mxu0
        %717 = vmatprep.mubr.bf16.mxu0 0
        %718 = vmatmul.mubr.bf16.gmra.mrb[0].mxu0 %v442
        %v719 = vpop.f32.mrb[0].mxu0
        %v720 = vadd.f32 %v475, %v719
        %v721 = vpop.f32.mrb[0].mxu0
        %v722 = vpop.f32.mrb[0].mxu0
        %v723 = vadd.f32 %v475, %v722
        %v724 = vpop.f32.mrb[0].mxu0
        %725 = vmatprep.mubr.bf16.mxu0 0
        %726 = vmatmul.mubr.bf16.gmra.mrb[0].mxu0 %v443
        %v727 = vpop.f32.mrb[0].mxu0
        %v728 = vadd.f32 %v475, %v727
        %v729 = vpop.f32.mrb[0].mxu0
        %v730 = vpop.f32.mrb[0].mxu0
        %v731 = vadd.f32 %v475, %v730
        %v732 = vpop.f32.mrb[0].mxu0
        %733 = vmatprep.mubr.bf16.mxu0 0
        %734 = vmatmul.mubr.bf16.gmra.mrb[0].mxu0 %v444
        %v735 = vpop.f32.mrb[0].mxu0
        %v736 = vadd.f32 %v475, %v735
        %v737 = vpop.f32.mrb[0].mxu0
        %v738 = vpop.f32.mrb[0].mxu0
        %v739 = vadd.f32 %v475, %v738
        %v740 = vpop.f32.mrb[0].mxu0
        %741 = vmatprep.mubr.bf16.mxu0 0
        %742 = vmatmul.mubr.bf16.gmra.mrb[0].mxu0 %v445
        %v743 = vpop.f32.mrb[0].mxu0
        %v744 = vadd.f32 %v475, %v743
        %v745 = vpop.f32.mrb[0].mxu0
        %v746 = vpop.f32.mrb[0].mxu0
        %v747 = vadd.f32 %v475, %v746
        %v748 = vpop.f32.mrb[0].mxu0
        %749 = vmatprep.mubr.bf16.mxu0 0
        %750 = vmatmul.mubr.bf16.gmra.mrb[0].mxu0 %v446
        %v751 = vpop.f32.mrb[0].mxu0
        %v752 = vadd.f32 %v475, %v751
        %v753 = vpop.f32.mrb[0].mxu0
        %v754 = vpop.f32.mrb[0].mxu0
        %v755 = vadd.f32 %v475, %v754
        %v756 = vpop.f32.mrb[0].mxu0
        %757 = vmatprep.mubr.bf16.mxu0 0
        %758 = vmatmul.mubr.bf16.gmra.mrb[0].mxu0 %v447
        %v759 = vpop.f32.mrb[0].mxu0
        %v760 = vadd.f32 %v475, %v759
        %v761 = vpop.f32.mrb[0].mxu0
        %v762 = vpop.f32.mrb[0].mxu0
        %v763 = vadd.f32 %v475, %v762
        %v764 = vpop.f32.mrb[0].mxu0
        %765 = vmatprep.mubr.bf16.mxu0 0
        %766 = vmatmul.mubr.bf16.gmra.mrb[0].mxu0 %v448
        %v767 = vpop.f32.mrb[0].mxu0
        %v768 = vadd.f32 %v475, %v767
        %v769 = vpop.f32.mrb[0].mxu0
        %v770 = vpop.f32.mrb[0].mxu0
        %v771 = vadd.f32 %v475, %v770
        %v772 = vpop.f32.mrb[0].mxu0
        %773 = vmatprep.mubr.bf16.mxu0 0
        %774 = vmatmul.mubr.bf16.gmra.mrb[0].mxu0 %v449
        %v775 = vpop.f32.mrb[0].mxu0
        %v776 = vadd.f32 %v475, %v775
        %v777 = vpop.f32.mrb[0].mxu0
        %v778 = vpop.f32.mrb[0].mxu0
        %v779 = vadd.f32 %v475, %v778
        %v780 = vpop.f32.mrb[0].mxu0
        %781 = vmatprep.mubr.bf16.mxu0 0
        %782 = vmatmul.mubr.bf16.gmra.mrb[0].mxu0 %v450
        %v783 = vpop.f32.mrb[0].mxu0
        %v784 = vadd.f32 %v475, %v783
        %v785 = vpop.f32.mrb[0].mxu0
        %v786 = vpop.f32.mrb[0].mxu0
        %v787 = vadd.f32 %v475, %v786
        %v788 = vpop.f32.mrb[0].mxu0
        %789 = vmatprep.mubr.bf16.mxu0 0
        %790 = vmatmul.mubr.bf16.gmra.mrb[0].mxu0 %v451
        %v791 = vpop.f32.mrb[0].mxu0
        %v792 = vadd.f32 %v475, %v791
        %v793 = vpop.f32.mrb[0].mxu0
        %v794 = vpop.f32.mrb[0].mxu0
        %v795 = vadd.f32 %v475, %v794
        %v796 = vpop.f32.mrb[0].mxu0
        %797 = vmatprep.mubr.bf16.mxu0 0
        %798 = vmatmul.mubr.bf16.gmra.mrb[0].mxu0 %v452
        %v799 = vpop.f32.mrb[0].mxu0
        %v800 = vadd.f32 %v475, %v799
        %v801 = vpop.f32.mrb[0].mxu0
        %v802 = vpop.f32.mrb[0].mxu0
        %v803 = vadd.f32 %v475, %v802
        %v804 = vpop.f32.mrb[0].mxu0
        %805 = vmatprep.mubr.bf16.mxu0 0
        %806 = vmatmul.mubr.bf16.gmra.mrb[0].mxu0 %v453
        %v807 = vpop.f32.mrb[0].mxu0
        %v808 = vadd.f32 %v475, %v807
        %v809 = vpop.f32.mrb[0].mxu0
        %v810 = vpop.f32.mrb[0].mxu0
        %v811 = vadd.f32 %v475, %v810
        %v812 = vpop.f32.mrb[0].mxu0
        %813 = vdwg.mxu0
        %v814 = vmax.f32 %v560, 0.0
        %v815 = vmax.f32 %v563, 0.0
        %v816 = vmax.f32 %v568, 0.0
        %v817 = vmax.f32 %v571, 0.0
        %v818 = vmax.f32 %v576, 0.0
        %v819 = vmax.f32 %v579, 0.0
        %v820 = vmax.f32 %v584, 0.0
        %v821 = vmax.f32 %v587, 0.0
        %v822 = vmax.f32 %v592, 0.0
        %v823 = vmax.f32 %v595, 0.0
        %v824 = vmax.f32 %v600, 0.0
        %v825 = vmax.f32 %v603, 0.0
        %v826 = vmax.f32 %v608, 0.0
        %v827 = vmax.f32 %v611, 0.0
        %v828 = vmax.f32 %v616, 0.0
        %v829 = vmax.f32 %v619, 0.0
        %v830 = vmax.f32 %v624, 0.0
        %v831 = vmax.f32 %v627, 0.0
        %v832 = vmax.f32 %v632, 0.0
        %v833 = vmax.f32 %v635, 0.0
        %v834 = vmax.f32 %v640, 0.0
        %v835 = vmax.f32 %v643, 0.0
        %v836 = vmax.f32 %v648, 0.0
        %v837 = vmax.f32 %v651, 0.0
        %v838 = vmax.f32 %v656, 0.0
        %v839 = vmax.f32 %v659, 0.0
        %v840 = vmax.f32 %v664, 0.0
        %v841 = vmax.f32 %v667, 0.0
        %v842 = vmax.f32 %v672, 0.0
        %v843 = vmax.f32 %v675, 0.0
        %v844 = vmax.f32 %v680, 0.0
        %v845 = vmax.f32 %v683, 0.0
        %v846 = vmax.f32 %v688, 0.0
        %v847 = vmax.f32 %v691, 0.0
        %v848 = vmax.f32 %v696, 0.0
        %v849 = vmax.f32 %v699, 0.0
        %v850 = vmax.f32 %v704, 0.0
        %v851 = vmax.f32 %v707, 0.0
        %v852 = vmax.f32 %v712, 0.0
        %v853 = vmax.f32 %v715, 0.0
        %v854 = vmax.f32 %v720, 0.0
        %v855 = vmax.f32 %v723, 0.0
        %v856 = vmax.f32 %v728, 0.0
        %v857 = vmax.f32 %v731, 0.0
        %v858 = vmax.f32 %v736, 0.0
        %v859 = vmax.f32 %v739, 0.0
        %v860 = vmax.f32 %v744, 0.0
        %v861 = vmax.f32 %v747, 0.0
        %v862 = vmax.f32 %v752, 0.0
        %v863 = vmax.f32 %v755, 0.0
        %v864 = vmax.f32 %v760, 0.0
        %v865 = vmax.f32 %v763, 0.0
        %v866 = vmax.f32 %v768, 0.0
        %v867 = vmax.f32 %v771, 0.0
        %v868 = vmax.f32 %v776, 0.0
        %v869 = vmax.f32 %v779, 0.0
        %v870 = vmax.f32 %v784, 0.0
        %v871 = vmax.f32 %v787, 0.0
        %v872 = vmax.f32 %v792, 0.0
        %v873 = vmax.f32 %v795, 0.0
        %v874 = vmax.f32 %v800, 0.0
        %v875 = vmax.f32 %v803, 0.0
        %v876 = vmax.f32 %v808, 0.0
        %v877 = vmax.f32 %v811, 0.0
        %v878 = vpack.c.bf16 %v815, %v814
        %v879 = vpack.c.bf16 %v817, %v816
        %v880 = vpack.c.bf16 %v819, %v818
        %v881 = vpack.c.bf16 %v821, %v820
        %v882 = vpack.c.bf16 %v823, %v822
        %v883 = vpack.c.bf16 %v825, %v824
        %v884 = vpack.c.bf16 %v827, %v826
        %v885 = vpack.c.bf16 %v829, %v828
        %v886 = vpack.c.bf16 %v831, %v830
        %v887 = vpack.c.bf16 %v833, %v832
        %v888 = vpack.c.bf16 %v835, %v834
        %v889 = vpack.c.bf16 %v837, %v836
        %v890 = vpack.c.bf16 %v839, %v838
        %v891 = vpack.c.bf16 %v841, %v840
        %v892 = vpack.c.bf16 %v843, %v842
        %v893 = vpack.c.bf16 %v845, %v844
        %v894 = vpack.c.bf16 %v847, %v846
        %v895 = vpack.c.bf16 %v849, %v848
        %v896 = vpack.c.bf16 %v851, %v850
        %v897 = vpack.c.bf16 %v853, %v852
        %v898 = vpack.c.bf16 %v855, %v854
        %v899 = vpack.c.bf16 %v857, %v856
        %v900 = vpack.c.bf16 %v859, %v858
        %v901 = vpack.c.bf16 %v861, %v860
        %v902 = vpack.c.bf16 %v863, %v862
        %v903 = vpack.c.bf16 %v865, %v864
        %v904 = vpack.c.bf16 %v867, %v866
        %v905 = vpack.c.bf16 %v869, %v868
        %v906 = vpack.c.bf16 %v871, %v870
        %v907 = vpack.c.bf16 %v873, %v872
        %v908 = vpack.c.bf16 %v875, %v874
        %v909 = vpack.c.bf16 %v877, %v876
        %v910 = vld [vmem:[#allocation7] sm:$0xf]
        %v911 = vld [vmem:[#allocation7 + $0x4] sm:$0xf]
        %v912 = vld [vmem:[#allocation7 + $0x8] sm:$0xf]
        %v913 = vld [vmem:[#allocation7 + $0xc] sm:$0xf]
        %v914 = vld [vmem:[#allocation7 + $0x10] sm:$0xf]
        %v915 = vld [vmem:[#allocation7 + $0x14] sm:$0xf]
        %v916 = vld [vmem:[#allocation7 + $0x18] sm:$0xf]
        %v917 = vld [vmem:[#allocation7 + $0x1c] sm:$0xf]
        %v918 = vld [vmem:[#allocation7 + $0x20] sm:$0xf]
        %v919 = vld [vmem:[#allocation7 + $0x24] sm:$0xf]
        %v920 = vld [vmem:[#allocation7 + $0x28] sm:$0xf]
        %v921 = vld [vmem:[#allocation7 + $0x2c] sm:$0xf]
        %v922 = vld [vmem:[#allocation7 + $0x30] sm:$0xf]
        %v923 = vld [vmem:[#allocation7 + $0x34] sm:$0xf]
        %v924 = vld [vmem:[#allocation7 + $0x38] sm:$0xf]
        %v925 = vld [vmem:[#allocation7 + $0x3c] sm:$0xf]
        %v926 = vld [vmem:[%s4] sm:$0x1]
        %v928 = vlaneseq
        %v929 = vshrl.u32 %v928, 7
        %v930 = vsub.s32 0, %v929
        %v931 = vrot.slane %v926, %v930
        %v949 = vunpack.c.l.b16 %v910
        %v950 = vunpack.c.l.b16 %v911
        %v951 = vunpack.c.l.b16 %v912
        %v952 = vunpack.c.l.b16 %v913
        %v953 = vunpack.c.l.b16 %v914
        %v954 = vunpack.c.l.b16 %v915
        %v955 = vunpack.c.l.b16 %v916
        %v956 = vunpack.c.l.b16 %v917
        %v957 = vunpack.c.l.b16 %v918
        %v958 = vunpack.c.l.b16 %v919
        %v959 = vunpack.c.l.b16 %v920
        %v960 = vunpack.c.l.b16 %v921
        %v961 = vunpack.c.l.b16 %v922
        %v962 = vunpack.c.l.b16 %v923
        %v963 = vunpack.c.l.b16 %v924
        %v964 = vunpack.c.l.b16 %v925
        %v965 = vpack.c.b16 %v950, %v949
        %v966 = vpack.c.b16 %v952, %v951
        %v967 = vpack.c.b16 %v954, %v953
        %v968 = vpack.c.b16 %v956, %v955
        %v969 = vpack.c.b16 %v958, %v957
        %v970 = vpack.c.b16 %v960, %v959
        %v971 = vpack.c.b16 %v962, %v961
        %v972 = vpack.c.b16 %v964, %v963
        %981 = vmatprep.subr.bf16.mxu0 0
        %982 = vmatpush1.bf16.msra.mxu0 %v965
        %983 = vmatprep.subr.bf16.mxu0 0
        %984 = vmatpush1.bf16.msra.mxu0 %v966
        %985 = vmatprep.subr.bf16.mxu0 0
        %986 = vmatpush1.bf16.msra.mxu0 %v967
        %987 = vmatprep.subr.bf16.mxu0 0
        %988 = vmatpush1.bf16.msra.mxu0 %v968
        %989 = vmatprep.subr.bf16.mxu0 0
        %990 = vmatpush1.bf16.msra.mxu0 %v969
        %991 = vmatprep.subr.bf16.mxu0 0
        %992 = vmatpush1.bf16.msra.mxu0 %v970
        %993 = vmatprep.subr.bf16.mxu0 0
        %994 = vmatpush1.bf16.msra.mxu0 %v971
        %995 = vmatprep.subr.bf16.mxu0 0
        %996 = vmatpush1.bf16.msra.mxu0 %v972
        %997 = vmatprep.subr.bf16.mxu0 0
        %998 = vmatpush1.bf16.msra.mxu0 0
        %999 = vmatprep.subr.bf16.mxu0 0
        %1000 = vmatpush1.bf16.msra.mxu0 0
        %1001 = vmatprep.subr.bf16.mxu0 0
        %1002 = vmatpush1.bf16.msra.mxu0 0
        %1003 = vmatprep.subr.bf16.mxu0 0
        %1004 = vmatpush1.bf16.msra.mxu0 0
        %1005 = vmatprep.subr.bf16.mxu0 0
        %1006 = vmatpush1.bf16.msra.mxu0 0
        %1007 = vmatprep.subr.bf16.mxu0 0
        %1008 = vmatpush1.bf16.msra.mxu0 0
        %1009 = vmatprep.subr.bf16.mxu0 0
        %1010 = vmatpush1.bf16.msra.mxu0 0
        %1011 = vmatprep.subr.bf16.mxu0 0
        %1012 = vmatpush1.bf16.msra.mxu0 0
        %1013 = vmatprep.mubr.bf16.mxu0 0
        %1014 = vmatmul.mubr.bf16.gmra.mrb[0].mxu0 %v878
        %v1015 = vpop.f32.mrb[0].mxu0
        %v1016 = vadd.f32 %v931, %v1015
        %v1017 = vpop.f32.mrb[0].mxu0
        %v1018 = vpop.f32.mrb[0].mxu0
        %v1019 = vadd.f32 %v931, %v1018
        %v1020 = vpop.f32.mrb[0].mxu0
        %1021 = vmatprep.mubr.bf16.mxu0 0
        %1022 = vmatmul.mubr.bf16.gmra.mrb[0].mxu0 %v879
        %v1023 = vpop.f32.mrb[0].mxu0
        %v1024 = vadd.f32 %v931, %v1023
        %v1025 = vpop.f32.mrb[0].mxu0
        %v1026 = vpop.f32.mrb[0].mxu0
        %v1027 = vadd.f32 %v931, %v1026
        %v1028 = vpop.f32.mrb[0].mxu0
        %1029 = vmatprep.mubr.bf16.mxu0 0
        %1030 = vmatmul.mubr.bf16.gmra.mrb[0].mxu0 %v880
        %v1031 = vpop.f32.mrb[0].mxu0
        %v1032 = vadd.f32 %v931, %v1031
        %v1033 = vpop.f32.mrb[0].mxu0
        %v1034 = vpop.f32.mrb[0].mxu0
        %v1035 = vadd.f32 %v931, %v1034
        %v1036 = vpop.f32.mrb[0].mxu0
        %1037 = vmatprep.mubr.bf16.mxu0 0
        %1038 = vmatmul.mubr.bf16.gmra.mrb[0].mxu0 %v881
        %v1039 = vpop.f32.mrb[0].mxu0
        %v1040 = vadd.f32 %v931, %v1039
        %v1041 = vpop.f32.mrb[0].mxu0
        %v1042 = vpop.f32.mrb[0].mxu0
        %v1043 = vadd.f32 %v931, %v1042
        %v1044 = vpop.f32.mrb[0].mxu0
        %1045 = vmatprep.mubr.bf16.mxu0 0
        %1046 = vmatmul.mubr.bf16.gmra.mrb[0].mxu0 %v882
        %v1047 = vpop.f32.mrb[0].mxu0
        %v1048 = vadd.f32 %v931, %v1047
        %v1049 = vpop.f32.mrb[0].mxu0
        %v1050 = vpop.f32.mrb[0].mxu0
        %v1051 = vadd.f32 %v931, %v1050
        %v1052 = vpop.f32.mrb[0].mxu0
        %1053 = vmatprep.mubr.bf16.mxu0 0
        %1054 = vmatmul.mubr.bf16.gmra.mrb[0].mxu0 %v883
        %v1055 = vpop.f32.mrb[0].mxu0
        %v1056 = vadd.f32 %v931, %v1055
        %v1057 = vpop.f32.mrb[0].mxu0
        %v1058 = vpop.f32.mrb[0].mxu0
        %v1059 = vadd.f32 %v931, %v1058
        %v1060 = vpop.f32.mrb[0].mxu0
        %1061 = vmatprep.mubr.bf16.mxu0 0
        %1062 = vmatmul.mubr.bf16.gmra.mrb[0].mxu0 %v884
        %v1063 = vpop.f32.mrb[0].mxu0
        %v1064 = vadd.f32 %v931, %v1063
        %v1065 = vpop.f32.mrb[0].mxu0
        %v1066 = vpop.f32.mrb[0].mxu0
        %v1067 = vadd.f32 %v931, %v1066
        %v1068 = vpop.f32.mrb[0].mxu0
        %1069 = vmatprep.mubr.bf16.mxu0 0
        %1070 = vmatmul.mubr.bf16.gmra.mrb[0].mxu0 %v885
        %v1071 = vpop.f32.mrb[0].mxu0
        %v1072 = vadd.f32 %v931, %v1071
        %v1073 = vpop.f32.mrb[0].mxu0
        %v1074 = vpop.f32.mrb[0].mxu0
        %v1075 = vadd.f32 %v931, %v1074
        %v1076 = vpop.f32.mrb[0].mxu0
        %1077 = vmatprep.mubr.bf16.mxu0 0
        %1078 = vmatmul.mubr.bf16.gmra.mrb[0].mxu0 %v886
        %v1079 = vpop.f32.mrb[0].mxu0
        %v1080 = vadd.f32 %v931, %v1079
        %v1081 = vpop.f32.mrb[0].mxu0
        %v1082 = vpop.f32.mrb[0].mxu0
        %v1083 = vadd.f32 %v931, %v1082
        %v1084 = vpop.f32.mrb[0].mxu0
        %1085 = vmatprep.mubr.bf16.mxu0 0
        %1086 = vmatmul.mubr.bf16.gmra.mrb[0].mxu0 %v887
        %v1087 = vpop.f32.mrb[0].mxu0
        %v1088 = vadd.f32 %v931, %v1087
        %v1089 = vpop.f32.mrb[0].mxu0
        %v1090 = vpop.f32.mrb[0].mxu0
        %v1091 = vadd.f32 %v931, %v1090
        %v1092 = vpop.f32.mrb[0].mxu0
        %1093 = vmatprep.mubr.bf16.mxu0 0
        %1094 = vmatmul.mubr.bf16.gmra.mrb[0].mxu0 %v888
        %v1095 = vpop.f32.mrb[0].mxu0
        %v1096 = vadd.f32 %v931, %v1095
        %v1097 = vpop.f32.mrb[0].mxu0
        %v1098 = vpop.f32.mrb[0].mxu0
        %v1099 = vadd.f32 %v931, %v1098
        %v1100 = vpop.f32.mrb[0].mxu0
        %1101 = vmatprep.mubr.bf16.mxu0 0
        %1102 = vmatmul.mubr.bf16.gmra.mrb[0].mxu0 %v889
        %v1103 = vpop.f32.mrb[0].mxu0
        %v1104 = vadd.f32 %v931, %v1103
        %v1105 = vpop.f32.mrb[0].mxu0
        %v1106 = vpop.f32.mrb[0].mxu0
        %v1107 = vadd.f32 %v931, %v1106
        %v1108 = vpop.f32.mrb[0].mxu0
        %1109 = vmatprep.mubr.bf16.mxu0 0
        %1110 = vmatmul.mubr.bf16.gmra.mrb[0].mxu0 %v890
        %v1111 = vpop.f32.mrb[0].mxu0
        %v1112 = vadd.f32 %v931, %v1111
        %v1113 = vpop.f32.mrb[0].mxu0
        %v1114 = vpop.f32.mrb[0].mxu0
        %v1115 = vadd.f32 %v931, %v1114
        %v1116 = vpop.f32.mrb[0].mxu0
        %1117 = vmatprep.mubr.bf16.mxu0 0
        %1118 = vmatmul.mubr.bf16.gmra.mrb[0].mxu0 %v891
        %v1119 = vpop.f32.mrb[0].mxu0
        %v1120 = vadd.f32 %v931, %v1119
        %v1121 = vpop.f32.mrb[0].mxu0
        %v1122 = vpop.f32.mrb[0].mxu0
        %v1123 = vadd.f32 %v931, %v1122
        %v1124 = vpop.f32.mrb[0].mxu0
        %1125 = vmatprep.mubr.bf16.mxu0 0
        %1126 = vmatmul.mubr.bf16.gmra.mrb[0].mxu0 %v892
        %v1127 = vpop.f32.mrb[0].mxu0
        %v1128 = vadd.f32 %v931, %v1127
        %v1129 = vpop.f32.mrb[0].mxu0
        %v1130 = vpop.f32.mrb[0].mxu0
        %v1131 = vadd.f32 %v931, %v1130
        %v1132 = vpop.f32.mrb[0].mxu0
        %1133 = vmatprep.mubr.bf16.mxu0 0
        %1134 = vmatmul.mubr.bf16.gmra.mrb[0].mxu0 %v893
        %v1135 = vpop.f32.mrb[0].mxu0
        %v1136 = vadd.f32 %v931, %v1135
        %v1137 = vpop.f32.mrb[0].mxu0
        %v1138 = vpop.f32.mrb[0].mxu0
        %v1139 = vadd.f32 %v931, %v1138
        %v1140 = vpop.f32.mrb[0].mxu0
        %1141 = vmatprep.mubr.bf16.mxu0 0
        %1142 = vmatmul.mubr.bf16.gmra.mrb[0].mxu0 %v894
        %v1143 = vpop.f32.mrb[0].mxu0
        %v1144 = vadd.f32 %v931, %v1143
        %v1145 = vpop.f32.mrb[0].mxu0
        %v1146 = vpop.f32.mrb[0].mxu0
        %v1147 = vadd.f32 %v931, %v1146
        %v1148 = vpop.f32.mrb[0].mxu0
        %1149 = vmatprep.mubr.bf16.mxu0 0
        %1150 = vmatmul.mubr.bf16.gmra.mrb[0].mxu0 %v895
        %v1151 = vpop.f32.mrb[0].mxu0
        %v1152 = vadd.f32 %v931, %v1151
        %v1153 = vpop.f32.mrb[0].mxu0
        %v1154 = vpop.f32.mrb[0].mxu0
        %v1155 = vadd.f32 %v931, %v1154
        %v1156 = vpop.f32.mrb[0].mxu0
        %1157 = vmatprep.mubr.bf16.mxu0 0
        %1158 = vmatmul.mubr.bf16.gmra.mrb[0].mxu0 %v896
        %v1159 = vpop.f32.mrb[0].mxu0
        %v1160 = vadd.f32 %v931, %v1159
        %v1161 = vpop.f32.mrb[0].mxu0
        %v1162 = vpop.f32.mrb[0].mxu0
        %v1163 = vadd.f32 %v931, %v1162
        %v1164 = vpop.f32.mrb[0].mxu0
        %1165 = vmatprep.mubr.bf16.mxu0 0
        %1166 = vmatmul.mubr.bf16.gmra.mrb[0].mxu0 %v897
        %v1167 = vpop.f32.mrb[0].mxu0
        %v1168 = vadd.f32 %v931, %v1167
        %v1169 = vpop.f32.mrb[0].mxu0
        %v1170 = vpop.f32.mrb[0].mxu0
        %v1171 = vadd.f32 %v931, %v1170
        %v1172 = vpop.f32.mrb[0].mxu0
        %1173 = vmatprep.mubr.bf16.mxu0 0
        %1174 = vmatmul.mubr.bf16.gmra.mrb[0].mxu0 %v898
        %v1175 = vpop.f32.mrb[0].mxu0
        %v1176 = vadd.f32 %v931, %v1175
        %v1177 = vpop.f32.mrb[0].mxu0
        %v1178 = vpop.f32.mrb[0].mxu0
        %v1179 = vadd.f32 %v931, %v1178
        %v1180 = vpop.f32.mrb[0].mxu0
        %1181 = vmatprep.mubr.bf16.mxu0 0
        %1182 = vmatmul.mubr.bf16.gmra.mrb[0].mxu0 %v899
        %v1183 = vpop.f32.mrb[0].mxu0
        %v1184 = vadd.f32 %v931, %v1183
        %v1185 = vpop.f32.mrb[0].mxu0
        %v1186 = vpop.f32.mrb[0].mxu0
        %v1187 = vadd.f32 %v931, %v1186
        %v1188 = vpop.f32.mrb[0].mxu0
        %1189 = vmatprep.mubr.bf16.mxu0 0
        %1190 = vmatmul.mubr.bf16.gmra.mrb[0].mxu0 %v900
        %v1191 = vpop.f32.mrb[0].mxu0
        %v1192 = vadd.f32 %v931, %v1191
        %v1193 = vpop.f32.mrb[0].mxu0
        %v1194 = vpop.f32.mrb[0].mxu0
        %v1195 = vadd.f32 %v931, %v1194
        %v1196 = vpop.f32.mrb[0].mxu0
        %1197 = vmatprep.mubr.bf16.mxu0 0
        %1198 = vmatmul.mubr.bf16.gmra.mrb[0].mxu0 %v901
        %v1199 = vpop.f32.mrb[0].mxu0
        %v1200 = vadd.f32 %v931, %v1199
        %v1201 = vpop.f32.mrb[0].mxu0
        %v1202 = vpop.f32.mrb[0].mxu0
        %v1203 = vadd.f32 %v931, %v1202
        %v1204 = vpop.f32.mrb[0].mxu0
        %1205 = vmatprep.mubr.bf16.mxu0 0
        %1206 = vmatmul.mubr.bf16.gmra.mrb[0].mxu0 %v902
        %v1207 = vpop.f32.mrb[0].mxu0
        %v1208 = vadd.f32 %v931, %v1207
        %v1209 = vpop.f32.mrb[0].mxu0
        %v1210 = vpop.f32.mrb[0].mxu0
        %v1211 = vadd.f32 %v931, %v1210
        %v1212 = vpop.f32.mrb[0].mxu0
        %1213 = vmatprep.mubr.bf16.mxu0 0
        %1214 = vmatmul.mubr.bf16.gmra.mrb[0].mxu0 %v903
        %v1215 = vpop.f32.mrb[0].mxu0
        %v1216 = vadd.f32 %v931, %v1215
        %v1217 = vpop.f32.mrb[0].mxu0
        %v1218 = vpop.f32.mrb[0].mxu0
        %v1219 = vadd.f32 %v931, %v1218
        %v1220 = vpop.f32.mrb[0].mxu0
        %1221 = vmatprep.mubr.bf16.mxu0 0
        %1222 = vmatmul.mubr.bf16.gmra.mrb[0].mxu0 %v904
        %v1223 = vpop.f32.mrb[0].mxu0
        %v1224 = vadd.f32 %v931, %v1223
        %v1225 = vpop.f32.mrb[0].mxu0
        %v1226 = vpop.f32.mrb[0].mxu0
        %v1227 = vadd.f32 %v931, %v1226
        %v1228 = vpop.f32.mrb[0].mxu0
        %1229 = vmatprep.mubr.bf16.mxu0 0
        %1230 = vmatmul.mubr.bf16.gmra.mrb[0].mxu0 %v905
        %v1231 = vpop.f32.mrb[0].mxu0
        %v1232 = vadd.f32 %v931, %v1231
        %v1233 = vpop.f32.mrb[0].mxu0
        %v1234 = vpop.f32.mrb[0].mxu0
        %v1235 = vadd.f32 %v931, %v1234
        %v1236 = vpop.f32.mrb[0].mxu0
        %1237 = vmatprep.mubr.bf16.mxu0 0
        %1238 = vmatmul.mubr.bf16.gmra.mrb[0].mxu0 %v906
        %v1239 = vpop.f32.mrb[0].mxu0
        %v1240 = vadd.f32 %v931, %v1239
        %v1241 = vpop.f32.mrb[0].mxu0
        %v1242 = vpop.f32.mrb[0].mxu0
        %v1243 = vadd.f32 %v931, %v1242
        %v1244 = vpop.f32.mrb[0].mxu0
        %1245 = vmatprep.mubr.bf16.mxu0 0
        %1246 = vmatmul.mubr.bf16.gmra.mrb[0].mxu0 %v907
        %v1247 = vpop.f32.mrb[0].mxu0
        %v1248 = vadd.f32 %v931, %v1247
        %v1249 = vpop.f32.mrb[0].mxu0
        %v1250 = vpop.f32.mrb[0].mxu0
        %v1251 = vadd.f32 %v931, %v1250
        %v1252 = vpop.f32.mrb[0].mxu0
        %1253 = vmatprep.mubr.bf16.mxu0 0
        %1254 = vmatmul.mubr.bf16.gmra.mrb[0].mxu0 %v908
        %v1255 = vpop.f32.mrb[0].mxu0
        %v1256 = vadd.f32 %v931, %v1255
        %v1257 = vpop.f32.mrb[0].mxu0
        %v1258 = vpop.f32.mrb[0].mxu0
        %v1259 = vadd.f32 %v931, %v1258
        %v1260 = vpop.f32.mrb[0].mxu0
        %1261 = vmatprep.mubr.bf16.mxu0 0
        %1262 = vmatmul.mubr.bf16.gmra.mrb[0].mxu0 %v909
        %v1263 = vpop.f32.mrb[0].mxu0
        %v1264 = vadd.f32 %v931, %v1263
        %v1265 = vpop.f32.mrb[0].mxu0
        %v1266 = vpop.f32.mrb[0].mxu0
        %v1267 = vadd.f32 %v931, %v1266
        %v1268 = vpop.f32.mrb[0].mxu0
        %1269 = vdwg.mxu0
        %v1270 = vmax.f32 %v1016, 0.0
        %v1271 = vmax.f32 %v1019, 0.0
        %v1272 = vmax.f32 %v1024, 0.0
        %v1273 = vmax.f32 %v1027, 0.0
        %v1274 = vmax.f32 %v1032, 0.0
        %v1275 = vmax.f32 %v1035, 0.0
        %v1276 = vmax.f32 %v1040, 0.0
        %v1277 = vmax.f32 %v1043, 0.0
        %v1278 = vmax.f32 %v1048, 0.0
        %v1279 = vmax.f32 %v1051, 0.0
        %v1280 = vmax.f32 %v1056, 0.0
        %v1281 = vmax.f32 %v1059, 0.0
        %v1282 = vmax.f32 %v1064, 0.0
        %v1283 = vmax.f32 %v1067, 0.0
        %v1284 = vmax.f32 %v1072, 0.0
        %v1285 = vmax.f32 %v1075, 0.0
        %v1286 = vmax.f32 %v1080, 0.0
        %v1287 = vmax.f32 %v1083, 0.0
        %v1288 = vmax.f32 %v1088, 0.0
        %v1289 = vmax.f32 %v1091, 0.0
        %v1290 = vmax.f32 %v1096, 0.0
        %v1291 = vmax.f32 %v1099, 0.0
        %v1292 = vmax.f32 %v1104, 0.0
        %v1293 = vmax.f32 %v1107, 0.0
        %v1294 = vmax.f32 %v1112, 0.0
        %v1295 = vmax.f32 %v1115, 0.0
        %v1296 = vmax.f32 %v1120, 0.0
        %v1297 = vmax.f32 %v1123, 0.0
        %v1298 = vmax.f32 %v1128, 0.0
        %v1299 = vmax.f32 %v1131, 0.0
        %v1300 = vmax.f32 %v1136, 0.0
        %v1301 = vmax.f32 %v1139, 0.0
        %v1302 = vmax.f32 %v1144, 0.0
        %v1303 = vmax.f32 %v1147, 0.0
        %v1304 = vmax.f32 %v1152, 0.0
        %v1305 = vmax.f32 %v1155, 0.0
        %v1306 = vmax.f32 %v1160, 0.0
        %v1307 = vmax.f32 %v1163, 0.0
        %v1308 = vmax.f32 %v1168, 0.0
        %v1309 = vmax.f32 %v1171, 0.0
        %v1310 = vmax.f32 %v1176, 0.0
        %v1311 = vmax.f32 %v1179, 0.0
        %v1312 = vmax.f32 %v1184, 0.0
        %v1313 = vmax.f32 %v1187, 0.0
        %v1314 = vmax.f32 %v1192, 0.0
        %v1315 = vmax.f32 %v1195, 0.0
        %v1316 = vmax.f32 %v1200, 0.0
        %v1317 = vmax.f32 %v1203, 0.0
        %v1318 = vmax.f32 %v1208, 0.0
        %v1319 = vmax.f32 %v1211, 0.0
        %v1320 = vmax.f32 %v1216, 0.0
        %v1321 = vmax.f32 %v1219, 0.0
        %v1322 = vmax.f32 %v1224, 0.0
        %v1323 = vmax.f32 %v1227, 0.0
        %v1324 = vmax.f32 %v1232, 0.0
        %v1325 = vmax.f32 %v1235, 0.0
        %v1326 = vmax.f32 %v1240, 0.0
        %v1327 = vmax.f32 %v1243, 0.0
        %v1328 = vmax.f32 %v1248, 0.0
        %v1329 = vmax.f32 %v1251, 0.0
        %v1330 = vmax.f32 %v1256, 0.0
        %v1331 = vmax.f32 %v1259, 0.0
        %v1332 = vmax.f32 %v1264, 0.0
        %v1333 = vmax.f32 %v1267, 0.0
        %v1334 = vpack.c.bf16 %v1271, %v1270
        %v1335 = vpack.c.bf16 %v1273, %v1272
        %v1336 = vpack.c.bf16 %v1275, %v1274
        %v1337 = vpack.c.bf16 %v1277, %v1276
        %v1338 = vpack.c.bf16 %v1279, %v1278
        %v1339 = vpack.c.bf16 %v1281, %v1280
        %v1340 = vpack.c.bf16 %v1283, %v1282
        %v1341 = vpack.c.bf16 %v1285, %v1284
        %v1342 = vpack.c.bf16 %v1287, %v1286
        %v1343 = vpack.c.bf16 %v1289, %v1288
        %v1344 = vpack.c.bf16 %v1291, %v1290
        %v1345 = vpack.c.bf16 %v1293, %v1292
        %v1346 = vpack.c.bf16 %v1295, %v1294
        %v1347 = vpack.c.bf16 %v1297, %v1296
        %v1348 = vpack.c.bf16 %v1299, %v1298
        %v1349 = vpack.c.bf16 %v1301, %v1300
        %v1350 = vpack.c.bf16 %v1303, %v1302
        %v1351 = vpack.c.bf16 %v1305, %v1304
        %v1352 = vpack.c.bf16 %v1307, %v1306
        %v1353 = vpack.c.bf16 %v1309, %v1308
        %v1354 = vpack.c.bf16 %v1311, %v1310
        %v1355 = vpack.c.bf16 %v1313, %v1312
        %v1356 = vpack.c.bf16 %v1315, %v1314
        %v1357 = vpack.c.bf16 %v1317, %v1316
        %v1358 = vpack.c.bf16 %v1319, %v1318
        %v1359 = vpack.c.bf16 %v1321, %v1320
        %v1360 = vpack.c.bf16 %v1323, %v1322
        %v1361 = vpack.c.bf16 %v1325, %v1324
        %v1362 = vpack.c.bf16 %v1327, %v1326
        %v1363 = vpack.c.bf16 %v1329, %v1328
        %v1364 = vpack.c.bf16 %v1331, %v1330
        %v1365 = vpack.c.bf16 %v1333, %v1332
        %v1366 = vld [vmem:[#allocation8] sm:$0xf]
        %v1367 = vld [vmem:[#allocation8 + $0x4] sm:$0xf]
        %v1368 = vld [vmem:[#allocation8 + $0x8] sm:$0xf]
        %v1369 = vld [vmem:[#allocation8 + $0xc] sm:$0xf]
        %v1370 = vld [vmem:[#allocation8 + $0x10] sm:$0xf]
        %v1371 = vld [vmem:[#allocation8 + $0x14] sm:$0xf]
        %v1372 = vld [vmem:[#allocation8 + $0x18] sm:$0xf]
        %v1373 = vld [vmem:[#allocation8 + $0x1c] sm:$0xf]
        %v1374 = vld [vmem:[#allocation8 + $0x20] sm:$0xf]
        %v1375 = vld [vmem:[#allocation8 + $0x24] sm:$0xf]
        %v1376 = vld [vmem:[#allocation8 + $0x28] sm:$0xf]
        %v1377 = vld [vmem:[#allocation8 + $0x2c] sm:$0xf]
        %v1378 = vld [vmem:[#allocation8 + $0x30] sm:$0xf]
        %v1379 = vld [vmem:[#allocation8 + $0x34] sm:$0xf]
        %v1380 = vld [vmem:[#allocation8 + $0x38] sm:$0xf]
        %v1381 = vld [vmem:[#allocation8 + $0x3c] sm:$0xf]
        %v1382 = vld [vmem:[%s6] sm:$0x1]
        %v1384 = vlaneseq
        %v1385 = vshrl.u32 %v1384, 7
        %v1386 = vsub.s32 0, %v1385
        %v1387 = vrot.slane %v1382, %v1386
        %v1405 = vunpack.c.l.b16 %v1366
        %v1406 = vunpack.c.l.b16 %v1367
        %v1407 = vunpack.c.l.b16 %v1368
        %v1408 = vunpack.c.l.b16 %v1369
        %v1409 = vunpack.c.l.b16 %v1370
        %v1410 = vunpack.c.l.b16 %v1371
        %v1411 = vunpack.c.l.b16 %v1372
        %v1412 = vunpack.c.l.b16 %v1373
        %v1413 = vunpack.c.l.b16 %v1374
        %v1414 = vunpack.c.l.b16 %v1375
        %v1415 = vunpack.c.l.b16 %v1376
        %v1416 = vunpack.c.l.b16 %v1377
        %v1417 = vunpack.c.l.b16 %v1378
        %v1418 = vunpack.c.l.b16 %v1379
        %v1419 = vunpack.c.l.b16 %v1380
        %v1420 = vunpack.c.l.b16 %v1381
        %v1421 = vpack.c.b16 %v1406, %v1405
        %v1422 = vpack.c.b16 %v1408, %v1407
        %v1423 = vpack.c.b16 %v1410, %v1409
        %v1424 = vpack.c.b16 %v1412, %v1411
        %v1425 = vpack.c.b16 %v1414, %v1413
        %v1426 = vpack.c.b16 %v1416, %v1415
        %v1427 = vpack.c.b16 %v1418, %v1417
        %v1428 = vpack.c.b16 %v1420, %v1419
        %1437 = vmatprep.subr.bf16.mxu0 0
        %1438 = vmatpush1.bf16.msra.mxu0 %v1421
        %1439 = vmatprep.subr.bf16.mxu0 0
        %1440 = vmatpush1.bf16.msra.mxu0 %v1422
        %1441 = vmatprep.subr.bf16.mxu0 0
        %1442 = vmatpush1.bf16.msra.mxu0 %v1423
        %1443 = vmatprep.subr.bf16.mxu0 0
        %1444 = vmatpush1.bf16.msra.mxu0 %v1424
        %1445 = vmatprep.subr.bf16.mxu0 0
        %1446 = vmatpush1.bf16.msra.mxu0 %v1425
        %1447 = vmatprep.subr.bf16.mxu0 0
        %1448 = vmatpush1.bf16.msra.mxu0 %v1426
        %1449 = vmatprep.subr.bf16.mxu0 0
        %1450 = vmatpush1.bf16.msra.mxu0 %v1427
        %1451 = vmatprep.subr.bf16.mxu0 0
        %1452 = vmatpush1.bf16.msra.mxu0 %v1428
        %1453 = vmatprep.subr.bf16.mxu0 0
        %1454 = vmatpush1.bf16.msra.mxu0 0
        %1455 = vmatprep.subr.bf16.mxu0 0
        %1456 = vmatpush1.bf16.msra.mxu0 0
        %1457 = vmatprep.subr.bf16.mxu0 0
        %1458 = vmatpush1.bf16.msra.mxu0 0
        %1459 = vmatprep.subr.bf16.mxu0 0
        %1460 = vmatpush1.bf16.msra.mxu0 0
        %1461 = vmatprep.subr.bf16.mxu0 0
        %1462 = vmatpush1.bf16.msra.mxu0 0
        %1463 = vmatprep.subr.bf16.mxu0 0
        %1464 = vmatpush1.bf16.msra.mxu0 0
        %1465 = vmatprep.subr.bf16.mxu0 0
        %1466 = vmatpush1.bf16.msra.mxu0 0
        %1467 = vmatprep.subr.bf16.mxu0 0
        %1468 = vmatpush1.bf16.msra.mxu0 0
        %1469 = vmatprep.mubr.bf16.mxu0 0
        %1470 = vmatmul.mubr.bf16.gmra.mrb[0].mxu0 %v1334
        %v1471 = vpop.f32.mrb[0].mxu0
        %v1472 = vadd.f32 %v1387, %v1471
        %v1473 = vpop.f32.mrb[0].mxu0
        %v1474 = vpop.f32.mrb[0].mxu0
        %v1475 = vadd.f32 %v1387, %v1474
        %v1476 = vpop.f32.mrb[0].mxu0
        %1477 = vmatprep.mubr.bf16.mxu0 0
        %1478 = vmatmul.mubr.bf16.gmra.mrb[0].mxu0 %v1335
        %v1479 = vpop.f32.mrb[0].mxu0
        %v1480 = vadd.f32 %v1387, %v1479
        %v1481 = vpop.f32.mrb[0].mxu0
        %v1482 = vpop.f32.mrb[0].mxu0
        %v1483 = vadd.f32 %v1387, %v1482
        %v1484 = vpop.f32.mrb[0].mxu0
        %1485 = vmatprep.mubr.bf16.mxu0 0
        %1486 = vmatmul.mubr.bf16.gmra.mrb[0].mxu0 %v1336
        %v1487 = vpop.f32.mrb[0].mxu0
        %v1488 = vadd.f32 %v1387, %v1487
        %v1489 = vpop.f32.mrb[0].mxu0
        %v1490 = vpop.f32.mrb[0].mxu0
        %v1491 = vadd.f32 %v1387, %v1490
        %v1492 = vpop.f32.mrb[0].mxu0
        %1493 = vmatprep.mubr.bf16.mxu0 0
        %1494 = vmatmul.mubr.bf16.gmra.mrb[0].mxu0 %v1337
        %v1495 = vpop.f32.mrb[0].mxu0
        %v1496 = vadd.f32 %v1387, %v1495
        %v1497 = vpop.f32.mrb[0].mxu0
        %v1498 = vpop.f32.mrb[0].mxu0
        %v1499 = vadd.f32 %v1387, %v1498
        %v1500 = vpop.f32.mrb[0].mxu0
        %1501 = vmatprep.mubr.bf16.mxu0 0
        %1502 = vmatmul.mubr.bf16.gmra.mrb[0].mxu0 %v1338
        %v1503 = vpop.f32.mrb[0].mxu0
        %v1504 = vadd.f32 %v1387, %v1503
        %v1505 = vpop.f32.mrb[0].mxu0
        %v1506 = vpop.f32.mrb[0].mxu0
        %v1507 = vadd.f32 %v1387, %v1506
        %v1508 = vpop.f32.mrb[0].mxu0
        %1509 = vmatprep.mubr.bf16.mxu0 0
        %1510 = vmatmul.mubr.bf16.gmra.mrb[0].mxu0 %v1339
        %v1511 = vpop.f32.mrb[0].mxu0
        %v1512 = vadd.f32 %v1387, %v1511
        %v1513 = vpop.f32.mrb[0].mxu0
        %v1514 = vpop.f32.mrb[0].mxu0
        %v1515 = vadd.f32 %v1387, %v1514
        %v1516 = vpop.f32.mrb[0].mxu0
        %1517 = vmatprep.mubr.bf16.mxu0 0
        %1518 = vmatmul.mubr.bf16.gmra.mrb[0].mxu0 %v1340
        %v1519 = vpop.f32.mrb[0].mxu0
        %v1520 = vadd.f32 %v1387, %v1519
        %v1521 = vpop.f32.mrb[0].mxu0
        %v1522 = vpop.f32.mrb[0].mxu0
        %v1523 = vadd.f32 %v1387, %v1522
        %v1524 = vpop.f32.mrb[0].mxu0
        %1525 = vmatprep.mubr.bf16.mxu0 0
        %1526 = vmatmul.mubr.bf16.gmra.mrb[0].mxu0 %v1341
        %v1527 = vpop.f32.mrb[0].mxu0
        %v1528 = vadd.f32 %v1387, %v1527
        %v1529 = vpop.f32.mrb[0].mxu0
        %v1530 = vpop.f32.mrb[0].mxu0
        %v1531 = vadd.f32 %v1387, %v1530
        %v1532 = vpop.f32.mrb[0].mxu0
        %1533 = vmatprep.mubr.bf16.mxu0 0
        %1534 = vmatmul.mubr.bf16.gmra.mrb[0].mxu0 %v1342
        %v1535 = vpop.f32.mrb[0].mxu0
        %v1536 = vadd.f32 %v1387, %v1535
        %v1537 = vpop.f32.mrb[0].mxu0
        %v1538 = vpop.f32.mrb[0].mxu0
        %v1539 = vadd.f32 %v1387, %v1538
        %v1540 = vpop.f32.mrb[0].mxu0
        %1541 = vmatprep.mubr.bf16.mxu0 0
        %1542 = vmatmul.mubr.bf16.gmra.mrb[0].mxu0 %v1343
        %v1543 = vpop.f32.mrb[0].mxu0
        %v1544 = vadd.f32 %v1387, %v1543
        %v1545 = vpop.f32.mrb[0].mxu0
        %v1546 = vpop.f32.mrb[0].mxu0
        %v1547 = vadd.f32 %v1387, %v1546
        %v1548 = vpop.f32.mrb[0].mxu0
        %1549 = vmatprep.mubr.bf16.mxu0 0
        %1550 = vmatmul.mubr.bf16.gmra.mrb[0].mxu0 %v1344
        %v1551 = vpop.f32.mrb[0].mxu0
        %v1552 = vadd.f32 %v1387, %v1551
        %v1553 = vpop.f32.mrb[0].mxu0
        %v1554 = vpop.f32.mrb[0].mxu0
        %v1555 = vadd.f32 %v1387, %v1554
        %v1556 = vpop.f32.mrb[0].mxu0
        %1557 = vmatprep.mubr.bf16.mxu0 0
        %1558 = vmatmul.mubr.bf16.gmra.mrb[0].mxu0 %v1345
        %v1559 = vpop.f32.mrb[0].mxu0
        %v1560 = vadd.f32 %v1387, %v1559
        %v1561 = vpop.f32.mrb[0].mxu0
        %v1562 = vpop.f32.mrb[0].mxu0
        %v1563 = vadd.f32 %v1387, %v1562
        %v1564 = vpop.f32.mrb[0].mxu0
        %1565 = vmatprep.mubr.bf16.mxu0 0
        %1566 = vmatmul.mubr.bf16.gmra.mrb[0].mxu0 %v1346
        %v1567 = vpop.f32.mrb[0].mxu0
        %v1568 = vadd.f32 %v1387, %v1567
        %v1569 = vpop.f32.mrb[0].mxu0
        %v1570 = vpop.f32.mrb[0].mxu0
        %v1571 = vadd.f32 %v1387, %v1570
        %v1572 = vpop.f32.mrb[0].mxu0
        %1573 = vmatprep.mubr.bf16.mxu0 0
        %1574 = vmatmul.mubr.bf16.gmra.mrb[0].mxu0 %v1347
        %v1575 = vpop.f32.mrb[0].mxu0
        %v1576 = vadd.f32 %v1387, %v1575
        %v1577 = vpop.f32.mrb[0].mxu0
        %v1578 = vpop.f32.mrb[0].mxu0
        %v1579 = vadd.f32 %v1387, %v1578
        %v1580 = vpop.f32.mrb[0].mxu0
        %1581 = vmatprep.mubr.bf16.mxu0 0
        %1582 = vmatmul.mubr.bf16.gmra.mrb[0].mxu0 %v1348
        %v1583 = vpop.f32.mrb[0].mxu0
        %v1584 = vadd.f32 %v1387, %v1583
        %v1585 = vpop.f32.mrb[0].mxu0
        %v1586 = vpop.f32.mrb[0].mxu0
        %v1587 = vadd.f32 %v1387, %v1586
        %v1588 = vpop.f32.mrb[0].mxu0
        %1589 = vmatprep.mubr.bf16.mxu0 0
        %1590 = vmatmul.mubr.bf16.gmra.mrb[0].mxu0 %v1349
        %v1591 = vpop.f32.mrb[0].mxu0
        %v1592 = vadd.f32 %v1387, %v1591
        %v1593 = vpop.f32.mrb[0].mxu0
        %v1594 = vpop.f32.mrb[0].mxu0
        %v1595 = vadd.f32 %v1387, %v1594
        %v1596 = vpop.f32.mrb[0].mxu0
        %1597 = vmatprep.mubr.bf16.mxu0 0
        %1598 = vmatmul.mubr.bf16.gmra.mrb[0].mxu0 %v1350
        %v1599 = vpop.f32.mrb[0].mxu0
        %v1600 = vadd.f32 %v1387, %v1599
        %v1601 = vpop.f32.mrb[0].mxu0
        %v1602 = vpop.f32.mrb[0].mxu0
        %v1603 = vadd.f32 %v1387, %v1602
        %v1604 = vpop.f32.mrb[0].mxu0
        %1605 = vmatprep.mubr.bf16.mxu0 0
        %1606 = vmatmul.mubr.bf16.gmra.mrb[0].mxu0 %v1351
        %v1607 = vpop.f32.mrb[0].mxu0
        %v1608 = vadd.f32 %v1387, %v1607
        %v1609 = vpop.f32.mrb[0].mxu0
        %v1610 = vpop.f32.mrb[0].mxu0
        %v1611 = vadd.f32 %v1387, %v1610
        %v1612 = vpop.f32.mrb[0].mxu0
        %1613 = vmatprep.mubr.bf16.mxu0 0
        %1614 = vmatmul.mubr.bf16.gmra.mrb[0].mxu0 %v1352
        %v1615 = vpop.f32.mrb[0].mxu0
        %v1616 = vadd.f32 %v1387, %v1615
        %v1617 = vpop.f32.mrb[0].mxu0
        %v1618 = vpop.f32.mrb[0].mxu0
        %v1619 = vadd.f32 %v1387, %v1618
        %v1620 = vpop.f32.mrb[0].mxu0
        %1621 = vmatprep.mubr.bf16.mxu0 0
        %1622 = vmatmul.mubr.bf16.gmra.mrb[0].mxu0 %v1353
        %v1623 = vpop.f32.mrb[0].mxu0
        %v1624 = vadd.f32 %v1387, %v1623
        %v1625 = vpop.f32.mrb[0].mxu0
        %v1626 = vpop.f32.mrb[0].mxu0
        %v1627 = vadd.f32 %v1387, %v1626
        %v1628 = vpop.f32.mrb[0].mxu0
        %1629 = vmatprep.mubr.bf16.mxu0 0
        %1630 = vmatmul.mubr.bf16.gmra.mrb[0].mxu0 %v1354
        %v1631 = vpop.f32.mrb[0].mxu0
        %v1632 = vadd.f32 %v1387, %v1631
        %v1633 = vpop.f32.mrb[0].mxu0
        %v1634 = vpop.f32.mrb[0].mxu0
        %v1635 = vadd.f32 %v1387, %v1634
        %v1636 = vpop.f32.mrb[0].mxu0
        %1637 = vmatprep.mubr.bf16.mxu0 0
        %1638 = vmatmul.mubr.bf16.gmra.mrb[0].mxu0 %v1355
        %v1639 = vpop.f32.mrb[0].mxu0
        %v1640 = vadd.f32 %v1387, %v1639
        %v1641 = vpop.f32.mrb[0].mxu0
        %v1642 = vpop.f32.mrb[0].mxu0
        %v1643 = vadd.f32 %v1387, %v1642
        %v1644 = vpop.f32.mrb[0].mxu0
        %1645 = vmatprep.mubr.bf16.mxu0 0
        %1646 = vmatmul.mubr.bf16.gmra.mrb[0].mxu0 %v1356
        %v1647 = vpop.f32.mrb[0].mxu0
        %v1648 = vadd.f32 %v1387, %v1647
        %v1649 = vpop.f32.mrb[0].mxu0
        %v1650 = vpop.f32.mrb[0].mxu0
        %v1651 = vadd.f32 %v1387, %v1650
        %v1652 = vpop.f32.mrb[0].mxu0
        %1653 = vmatprep.mubr.bf16.mxu0 0
        %1654 = vmatmul.mubr.bf16.gmra.mrb[0].mxu0 %v1357
        %v1655 = vpop.f32.mrb[0].mxu0
        %v1656 = vadd.f32 %v1387, %v1655
        %v1657 = vpop.f32.mrb[0].mxu0
        %v1658 = vpop.f32.mrb[0].mxu0
        %v1659 = vadd.f32 %v1387, %v1658
        %v1660 = vpop.f32.mrb[0].mxu0
        %1661 = vmatprep.mubr.bf16.mxu0 0
        %1662 = vmatmul.mubr.bf16.gmra.mrb[0].mxu0 %v1358
        %v1663 = vpop.f32.mrb[0].mxu0
        %v1664 = vadd.f32 %v1387, %v1663
        %v1665 = vpop.f32.mrb[0].mxu0
        %v1666 = vpop.f32.mrb[0].mxu0
        %v1667 = vadd.f32 %v1387, %v1666
        %v1668 = vpop.f32.mrb[0].mxu0
        %1669 = vmatprep.mubr.bf16.mxu0 0
        %1670 = vmatmul.mubr.bf16.gmra.mrb[0].mxu0 %v1359
        %v1671 = vpop.f32.mrb[0].mxu0
        %v1672 = vadd.f32 %v1387, %v1671
        %v1673 = vpop.f32.mrb[0].mxu0
        %v1674 = vpop.f32.mrb[0].mxu0
        %v1675 = vadd.f32 %v1387, %v1674
        %v1676 = vpop.f32.mrb[0].mxu0
        %1677 = vmatprep.mubr.bf16.mxu0 0
        %1678 = vmatmul.mubr.bf16.gmra.mrb[0].mxu0 %v1360
        %v1679 = vpop.f32.mrb[0].mxu0
        %v1680 = vadd.f32 %v1387, %v1679
        %v1681 = vpop.f32.mrb[0].mxu0
        %v1682 = vpop.f32.mrb[0].mxu0
        %v1683 = vadd.f32 %v1387, %v1682
        %v1684 = vpop.f32.mrb[0].mxu0
        %1685 = vmatprep.mubr.bf16.mxu0 0
        %1686 = vmatmul.mubr.bf16.gmra.mrb[0].mxu0 %v1361
        %v1687 = vpop.f32.mrb[0].mxu0
        %v1688 = vadd.f32 %v1387, %v1687
        %v1689 = vpop.f32.mrb[0].mxu0
        %v1690 = vpop.f32.mrb[0].mxu0
        %v1691 = vadd.f32 %v1387, %v1690
        %v1692 = vpop.f32.mrb[0].mxu0
        %1693 = vmatprep.mubr.bf16.mxu0 0
        %1694 = vmatmul.mubr.bf16.gmra.mrb[0].mxu0 %v1362
        %v1695 = vpop.f32.mrb[0].mxu0
        %v1696 = vadd.f32 %v1387, %v1695
        %v1697 = vpop.f32.mrb[0].mxu0
        %v1698 = vpop.f32.mrb[0].mxu0
        %v1699 = vadd.f32 %v1387, %v1698
        %v1700 = vpop.f32.mrb[0].mxu0
        %1701 = vmatprep.mubr.bf16.mxu0 0
        %1702 = vmatmul.mubr.bf16.gmra.mrb[0].mxu0 %v1363
        %v1703 = vpop.f32.mrb[0].mxu0
        %v1704 = vadd.f32 %v1387, %v1703
        %v1705 = vpop.f32.mrb[0].mxu0
        %v1706 = vpop.f32.mrb[0].mxu0
        %v1707 = vadd.f32 %v1387, %v1706
        %v1708 = vpop.f32.mrb[0].mxu0
        %1709 = vmatprep.mubr.bf16.mxu0 0
        %1710 = vmatmul.mubr.bf16.gmra.mrb[0].mxu0 %v1364
        %v1711 = vpop.f32.mrb[0].mxu0
        %v1712 = vadd.f32 %v1387, %v1711
        %v1713 = vpop.f32.mrb[0].mxu0
        %v1714 = vpop.f32.mrb[0].mxu0
        %v1715 = vadd.f32 %v1387, %v1714
        %v1716 = vpop.f32.mrb[0].mxu0
        %1717 = vmatprep.mubr.bf16.mxu0 0
        %1718 = vmatmul.mubr.bf16.gmra.mrb[0].mxu0 %v1365
        %v1719 = vpop.f32.mrb[0].mxu0
        %v1720 = vadd.f32 %v1387, %v1719
        %v1721 = vpop.f32.mrb[0].mxu0
        %v1722 = vpop.f32.mrb[0].mxu0
        %v1723 = vadd.f32 %v1387, %v1722
        %v1724 = vpop.f32.mrb[0].mxu0
        %1725 = vdwg.mxu0
        %1726 = vst [vmem:[%s346] sm:$0xff] %v1472
        %1727 = vst [vmem:[%s346 + $0x8] sm:$0xff] %v1475
        %1728 = vst [vmem:[%s346 + $0x10] sm:$0xff] %v1480
        %1729 = vst [vmem:[%s346 + $0x18] sm:$0xff] %v1483
        %1730 = vst [vmem:[%s346 + $0x20] sm:$0xff] %v1488
        %1731 = vst [vmem:[%s346 + $0x28] sm:$0xff] %v1491
        %1732 = vst [vmem:[%s346 + $0x30] sm:$0xff] %v1496
        %1733 = vst [vmem:[%s346 + $0x38] sm:$0xff] %v1499
        %1734 = vst [vmem:[%s346 + $0x40] sm:$0xff] %v1504
        %1735 = vst [vmem:[%s346 + $0x48] sm:$0xff] %v1507
        %1736 = vst [vmem:[%s346 + $0x50] sm:$0xff] %v1512
        %1737 = vst [vmem:[%s346 + $0x58] sm:$0xff] %v1515
        %1738 = vst [vmem:[%s346 + $0x60] sm:$0xff] %v1520
        %1739 = vst [vmem:[%s346 + $0x68] sm:$0xff] %v1523
        %1740 = vst [vmem:[%s346 + $0x70] sm:$0xff] %v1528
        %1741 = vst [vmem:[%s346 + $0x78] sm:$0xff] %v1531
        %1742 = vst [vmem:[%s346 + $0x80] sm:$0xff] %v1536
        %1743 = vst [vmem:[%s346 + $0x88] sm:$0xff] %v1539
        %1744 = vst [vmem:[%s346 + $0x90] sm:$0xff] %v1544
        %1745 = vst [vmem:[%s346 + $0x98] sm:$0xff] %v1547
        %1746 = vst [vmem:[%s346 + $0xa0] sm:$0xff] %v1552
        %1747 = vst [vmem:[%s346 + $0xa8] sm:$0xff] %v1555
        %1748 = vst [vmem:[%s346 + $0xb0] sm:$0xff] %v1560
        %1749 = vst [vmem:[%s346 + $0xb8] sm:$0xff] %v1563
        %1750 = vst [vmem:[%s346 + $0xc0] sm:$0xff] %v1568
        %1751 = vst [vmem:[%s346 + $0xc8] sm:$0xff] %v1571
        %1752 = vst [vmem:[%s346 + $0xd0] sm:$0xff] %v1576
        %1753 = vst [vmem:[%s346 + $0xd8] sm:$0xff] %v1579
        %1754 = vst [vmem:[%s346 + $0xe0] sm:$0xff] %v1584
        %1755 = vst [vmem:[%s346 + $0xe8] sm:$0xff] %v1587
        %1756 = vst [vmem:[%s346 + $0xf0] sm:$0xff] %v1592
        %1757 = vst [vmem:[%s346 + $0xf8] sm:$0xff] %v1595
        %1758 = vst [vmem:[%s346 + $0x100] sm:$0xff] %v1600
        %1759 = vst [vmem:[%s346 + $0x108] sm:$0xff] %v1603
        %1760 = vst [vmem:[%s346 + $0x110] sm:$0xff] %v1608
        %1761 = vst [vmem:[%s346 + $0x118] sm:$0xff] %v1611
        %1762 = vst [vmem:[%s346 + $0x120] sm:$0xff] %v1616
        %1763 = vst [vmem:[%s346 + $0x128] sm:$0xff] %v1619
        %1764 = vst [vmem:[%s346 + $0x130] sm:$0xff] %v1624
        %1765 = vst [vmem:[%s346 + $0x138] sm:$0xff] %v1627
        %1766 = vst [vmem:[%s346 + $0x140] sm:$0xff] %v1632
        %1767 = vst [vmem:[%s346 + $0x148] sm:$0xff] %v1635
        %1768 = vst [vmem:[%s346 + $0x150] sm:$0xff] %v1640
        %1769 = vst [vmem:[%s346 + $0x158] sm:$0xff] %v1643
        %1770 = vst [vmem:[%s346 + $0x160] sm:$0xff] %v1648
        %1771 = vst [vmem:[%s346 + $0x168] sm:$0xff] %v1651
        %1772 = vst [vmem:[%s346 + $0x170] sm:$0xff] %v1656
        %1773 = vst [vmem:[%s346 + $0x178] sm:$0xff] %v1659
        %1774 = vst [vmem:[%s346 + $0x180] sm:$0xff] %v1664
        %1775 = vst [vmem:[%s346 + $0x188] sm:$0xff] %v1667
        %1776 = vst [vmem:[%s346 + $0x190] sm:$0xff] %v1672
        %1777 = vst [vmem:[%s346 + $0x198] sm:$0xff] %v1675
        %1778 = vst [vmem:[%s346 + $0x1a0] sm:$0xff] %v1680
        %1779 = vst [vmem:[%s346 + $0x1a8] sm:$0xff] %v1683
        %1780 = vst [vmem:[%s346 + $0x1b0] sm:$0xff] %v1688
        %1781 = vst [vmem:[%s346 + $0x1b8] sm:$0xff] %v1691
        %1782 = vst [vmem:[%s346 + $0x1c0] sm:$0xff] %v1696
        %1783 = vst [vmem:[%s346 + $0x1c8] sm:$0xff] %v1699
        %1784 = vst [vmem:[%s346 + $0x1d0] sm:$0xff] %v1704
        %1785 = vst [vmem:[%s346 + $0x1d8] sm:$0xff] %v1707
        %1786 = vst [vmem:[%s346 + $0x1e0] sm:$0xff] %v1712
        %1787 = vst [vmem:[%s346 + $0x1e8] sm:$0xff] %v1715
        %1788 = vst [vmem:[%s346 + $0x1f0] sm:$0xff] %v1720
        %1789 = vst [vmem:[%s346 + $0x1f8] sm:$0xff] %v1723
        %s1790 = sand.u32 %s186, 1
        %s1791 = scalar_lea.sflag [#allocation4], %s1790
        %s1792 = sand.u32 %s186, 1
        %s1793 = smul.addr %s1792, 512
        %s1794 = scalar_lea.vmem [#allocation10], %s1793
        // Predicated region
        $region65: #{tpu_custom_call.1} parent=47 // pred_check
          %p1795 = pneg %p196
        $region66: #{tpu_custom_call.1} parent=47 // pred_check_branch
          %1797 = sbr.rel (%p1795) target = $region68
        $region67: #{tpu_custom_call.1} parent=47 // pred_region
          %s1798 = smul.u32 64, %s26
          %s1799 = ssub.s32 125, %s1798
          %p1800 = scmp.lt.s32.totalorder %s1799, 64
          %s1801 = scalar_select %p1800, %s1799, 64
          %s1802 = smul.u32 128, %s1801
          %s1804 = ssub.s32 8192, %s1802
          %1805 = vsyncadd %s1791, %s1804
          %p1806 = scmp.ne.s32.totalorder 0, %s1802
          %s1807 = smul.addr %s1798, 128
          %s1808 = scalar_lea.hbm %s7, %s1807
          %s1809 = smul.u32 8, %s1801
          %s1810 = sshll.u32 %s1794, 4
          %s1811 = int_to_ptr.vmem [resolvable:$true] %s1810
          %s1812 = sshll.u32 %s1809, 4
          %1816 = dma.vmem_to_hbm [thread:$0]  (%p1806), %s1811, %s1812, %s1808, %s1791, 128, 128, 8
        $region68: #{tpu_custom_call.1} parent=47 // pred_fallthru
          _
      $region48: #{tpu_custom_call.1} parent=5 // pred_fallthru
        _
      %p1817 = scmp.le.s32.totalorder 2, %s21
      // Predicated region
      $region69: #{tpu_custom_call.1} parent=5 // pred_check
        %p1818 = pneg %p1817
      $region70: #{tpu_custom_call.1} parent=5 // pred_check_branch
        %1820 = sbr.rel (%p1818) target = $region72
      $region71: #{tpu_custom_call.1} parent=5 // pred_region
        %s1821 = ssub.s32 %s21, 2
        // Predicated region
        $region73: #{tpu_custom_call.1} parent=71 // pred_check
          %p1822 = pneg %p202
        $region74: #{tpu_custom_call.1} parent=71 // pred_check_branch
          %1824 = sbr.rel (%p1822) target = $region76
        $region75: #{tpu_custom_call.1} parent=71 // pred_region
          %s1825 = sand.u32 %s187, 1
          %s1826 = scalar_lea.sflag [#allocation4], %s1825
          %s1827 = sand.u32 %s187, 1
          %s1828 = smul.addr %s1827, 512
          %s1829 = scalar_lea.vmem [#allocation10], %s1828
          %1830 = dma.done %s1826, 8192
        $region76: #{tpu_custom_call.1} parent=71 // pred_fallthru
          _
      $region72: #{tpu_custom_call.1} parent=5 // pred_fallthru
        _
    $region6: #{tpu_custom_call.1} parent=1 // loop_footer
      %s25 = sadd.s32 1, %s21
    $region7: #{tpu_custom_call.1} parent=1 // loop_footer_branch
      %20 = sbr.rel target = $region3
    $region8: #{tpu_custom_call.1} parent=1 // loop_exit
      _
    %1831 = vsyncpa [#allocation3], 1
    %s1832 = scalar_lea.sflag [#allocation3], 1
    %1833 = vsyncpa %s1832, 1
    %1834 = vsyncpa [#allocation6], 1
    %1835 = vsyncpa [#allocation9], 1
    %1836 = vsyncpa [#allocation4], 1
    %s1837 = scalar_lea.sflag [#allocation4], 1
    %1838 = vsyncpa %s1837, 1

</llo_original>
